<compile_context>
chip_gen: v7x
topology: tpu7x:2x2x1
jax: 0.10.0
libtpu: 0.0.40
codegen_flags: <defaults>
</compile_context>

<pallas_src>
import functools

import jax
import jax.numpy as jnp
from jax import lax
from jax.experimental import pallas as pl
from jax.experimental.pallas import tpu as pltpu

INPUT_SIZE = 8
HIDDEN = 64
NUM_LAYERS = 2
NUM_CLASSES = 13
FC_PAD = 128          # lane-dense output width (first NUM_CLASSES cols are real)
SUBLANE = 8           # pad batch up to a full sublane group


def lstm_fc_kernel(x_ref,                      # (T*Bp, IN)   time-major, batch-padded
                   wih0_ref, whh0_ref, b0_ref, # (IN,4H), (H,4H), (1,4H)
                   w1_ref, b1_ref,             # (2H,4H) = vstack(W_ih1, W_hh1), (1,4H)
                   wfc_ref, bfc_ref,           # (H,128), (1,128)  (lane-padded fc)
                   out_ref,                    # (Bp, 128)
                   xproj_ref):                 # VMEM scratch (T*Bp, 4H)
    TB, _ = x_ref.shape
    H = whh0_ref.shape[0]
    B = out_ref.shape[0]
    T = TB // B

    whh0 = whh0_ref[...]
    w1 = w1_ref[...]
    b1 = jnp.broadcast_to(b1_ref[...], (B, 4 * H))     # broadcast once, not per step

    # Hoisted layer-0 input projection for ALL time steps: one MXU call, bias folded.
    xproj_ref[...] = (jnp.dot(x_ref[...], wih0_ref[...],
                              preferred_element_type=jnp.float32)
                      + b0_ref[...])

    # Static lane mask: columns [2H, 3H) are the tanh ("g") gate of [i, f, g, o].
    lane = lax.broadcasted_iota(jnp.int32, (B, 4 * H), 1)
    is_g = (lane >= 2 * H) & (lane < 3 * H)

    def activate(gates):
        # Full-width EUP work + per-lane select; avoids 64-lane sliced activations.
        return jnp.where(is_g, jnp.tanh(gates), jax.nn.sigmoid(gates))

    def cell_tail(act, c):
        i = act[:, 0 * H:1 * H]
        f = act[:, 1 * H:2 * H]
        g = act[:, 2 * H:3 * H]
        o = act[:, 3 * H:4 * H]
        c_new = f * c + i * g
        h_new = o * jnp.tanh(c_new)
        return h_new, c_new

    def step(t, carry):
        h0, c0, h1, c1 = carry

        # Layer 0: only the recurrent matmul remains on the serial chain.
        row = pl.multiple_of(t * B, SUBLANE)
        g0 = xproj_ref[pl.ds(row, B), :] + jnp.dot(
            h0, whh0, preferred_element_type=jnp.float32)
        h0, c0 = cell_tail(activate(g0), c0)

        # Layer 1: single fused K=128 matmul for both gate projections.
        hcat = jnp.concatenate([h0, h1], axis=1)        # (B, 2H) = (B, 128)
        g1 = jnp.dot(hcat, w1, preferred_element_type=jnp.float32) + b1
        h1, c1 = cell_tail(activate(g1), c1)
        return h0, c0, h1, c1

    zeros = jnp.zeros((B, H), jnp.float32)
    _, _, h1, _ = lax.fori_loop(0, T, step, (zeros, zeros, zeros, zeros),
                                unroll=True)

    # Classifier on the last top-layer hidden state; lane-dense (B, 128) store.
    out_ref[...] = (jnp.dot(h1, wfc_ref[...], preferred_element_type=jnp.float32)
                    + bfc_ref[...])


@jax.jit
def lstm_model_forward(x_btd, params):
    """x_btd: (B, T, INPUT_SIZE) float32, batch_first (PyTorch convention)."""
    B, T, IN = x_btd.shape
    Bp = max(SUBLANE, ((B + SUBLANE - 1) // SUBLANE) * SUBLANE)

    # time-major + batch padded to a full sublane group, flattened for the big matmul
    x_tbd = jnp.transpose(x_btd, (1, 0, 2))                       # (T, B, IN)
    x_tbd = jnp.pad(x_tbd, ((0, 0), (0, Bp - B), (0, 0)))         # (T, Bp, IN)
    x2d = x_tbd.reshape(T * Bp, IN)

    # fuse layer-1 weights; lane-pad the classifier
    w1 = jnp.concatenate([params["wih1"], params["whh1"]], axis=0)   # (2H, 4H)
    C = params["wfc"].shape[1]
    wfc = jnp.pad(params["wfc"], ((0, 0), (0, FC_PAD - C)))
    bfc = jnp.pad(params["bfc"], ((0, 0), (0, FC_PAD - C)))

    inputs = (x2d,
              params["wih0"], params["whh0"], params["b0"],
              w1, params["b1"],
              wfc, bfc)

    vmem = pl.BlockSpec(memory_space=pltpu.MemorySpace.VMEM)
    out = pl.pallas_call(
        lstm_fc_kernel,
        out_shape=jax.ShapeDtypeStruct((Bp, FC_PAD), jnp.float32),
        in_specs=[vmem] * len(inputs),
        out_specs=vmem,
        scratch_shapes=[pltpu.VMEM((T * Bp, 4 * HIDDEN), jnp.float32)],
    )(*inputs)
    return out[:B, :C]


def init_params(key):
    """Deterministic params, stored pre-transposed for row-vector matmuls.

    PyTorch shapes: W_ih_l0 (4H, IN), W_hh_l0 (4H, H), b_* (4H,), fc.W (C, H).
    We store transposes and fold b_ih + b_hh into a single (1, 4H) bias per layer.
    """
    ks = jax.random.split(key, 10)
    scale = 1.0 / jnp.sqrt(HIDDEN)

    def u(k, shape):
        return jax.random.uniform(k, shape, jnp.float32, -scale, scale)

    return {
        "wih0": u(ks[0], (INPUT_SIZE, 4 * HIDDEN)),
        "whh0": u(ks[1], (HIDDEN, 4 * HIDDEN)),
        "b0":   u(ks[2], (1, 4 * HIDDEN)) + u(ks[3], (1, 4 * HIDDEN)),  # b_ih + b_hh
        "wih1": u(ks[4], (HIDDEN, 4 * HIDDEN)),
        "whh1": u(ks[5], (HIDDEN, 4 * HIDDEN)),
        "b1":   u(ks[6], (1, 4 * HIDDEN)) + u(ks[7], (1, 4 * HIDDEN)),
        "wfc":  u(ks[8], (HIDDEN, NUM_CLASSES)),
        "bfc":  u(ks[9], (1, NUM_CLASSES)),
    }


def _ref_cell(x_t, h, c, w_ih, w_hh, b, H):
    gates = x_t @ w_ih + h @ w_hh + b
    i = jax.nn.sigmoid(gates[:, 0 * H:1 * H])
    f = jax.nn.sigmoid(gates[:, 1 * H:2 * H])
    g = jnp.tanh(gates[:, 2 * H:3 * H])
    o = jax.nn.sigmoid(gates[:, 3 * H:4 * H])
    c_new = f * c + i * g
    h_new = o * jnp.tanh(c_new)
    return h_new, c_new


def reference_forward(x_btd, params):
    """Pure-JAX reference mirroring torch.nn.LSTM(batch_first=True) + Linear."""
    B, T, _ = x_btd.shape
    h0 = c0 = h1 = c1 = jnp.zeros((B, HIDDEN), jnp.float32)
    for t in range(T):
        x_t = x_btd[:, t, :]
        h0, c0 = _ref_cell(x_t, h0, c0, params["wih0"], params["whh0"],
                           params["b0"], HIDDEN)
        h1, c1 = _ref_cell(h0, h1, c1, params["wih1"], params["whh1"],
                           params["b1"], HIDDEN)
    return h1 @ params["wfc"] + params["bfc"]


if __name__ == "__main__":
    key = jax.random.PRNGKey(0)
    k_param, k_x = jax.random.split(key)

    B, T = 2, 8
    x = jax.random.normal(k_x, (B, T, INPUT_SIZE), jnp.float32)
    params = init_params(k_param)

    out = lstm_model_forward(x, params)
    out = jax.block_until_ready(out)

    ref = reference_forward(x, params)
    assert out.shape == (B, NUM_CLASSES)
    assert jnp.allclose(out, ref, rtol=2e-4, atol=2e-4), "mismatch vs JAX reference"

    print("KERNEL_OK")
</pallas_src>

<mosaic_0001>
module attributes {stable_mosaic.version = 11 : i64} {
  func.func @lstm_fc_kernel(%arg0: memref<64x8xf32, #tpu.memory_space<vmem>>, %arg1: memref<8x256xf32, #tpu.memory_space<vmem>>, %arg2: memref<64x256xf32, #tpu.memory_space<vmem>>, %arg3: memref<1x256xf32, #tpu.memory_space<vmem>>, %arg4: memref<128x256xf32, #tpu.memory_space<vmem>>, %arg5: memref<1x256xf32, #tpu.memory_space<vmem>>, %arg6: memref<64x128xf32, #tpu.memory_space<vmem>>, %arg7: memref<1x128xf32, #tpu.memory_space<vmem>>, %arg8: memref<8x128xf32, #tpu.memory_space<vmem>>, %arg9: memref<64x256xf32, #tpu.memory_space<vmem>>) attributes {dimension_semantics = [], scalar_prefetch = 0 : i64, scratch_operands = 1 : i64, tpu.core_type = #tpu.core_type<tc>} {
    %c0 = arith.constant 0 : index
    %c0_0 = arith.constant 0 : index
    %0 = vector.load %arg2[%c0, %c0_0] : memref<64x256xf32, #tpu.memory_space<vmem>>, vector<64x256xf32>
    %c0_1 = arith.constant 0 : index
    %c0_2 = arith.constant 0 : index
    %1 = vector.load %arg4[%c0_1, %c0_2] : memref<128x256xf32, #tpu.memory_space<vmem>>, vector<128x256xf32>
    %c0_3 = arith.constant 0 : index
    %c0_4 = arith.constant 0 : index
    %2 = vector.load %arg5[%c0_3, %c0_4] : memref<1x256xf32, #tpu.memory_space<vmem>>, vector<1x256xf32>
    %3 = vector.shape_cast %2 : vector<1x256xf32> to vector<1x256xf32>
    %4 = vector.broadcast %3 : vector<1x256xf32> to vector<8x256xf32>
    %c0_5 = arith.constant 0 : index
    %c0_6 = arith.constant 0 : index
    %5 = vector.load %arg0[%c0_5, %c0_6] : memref<64x8xf32, #tpu.memory_space<vmem>>, vector<64x8xf32>
    %c0_7 = arith.constant 0 : index
    %c0_8 = arith.constant 0 : index
    %6 = vector.load %arg1[%c0_7, %c0_8] : memref<8x256xf32, #tpu.memory_space<vmem>>, vector<8x256xf32>
    %cst = arith.constant dense<0.000000e+00> : vector<64x256xf32>
    %7 = tpu.matmul %5, %6, %cst {dimension_numbers = #tpu.dot_dimension_numbers<[1], [0], [0], [1], [0, 0, 1, 1], [], []>} : vector<64x8xf32>, vector<8x256xf32>, vector<64x256xf32> -> vector<64x256xf32>
    %c0_9 = arith.constant 0 : index
    %c0_10 = arith.constant 0 : index
    %8 = vector.load %arg3[%c0_9, %c0_10] : memref<1x256xf32, #tpu.memory_space<vmem>>, vector<1x256xf32>
    %9 = vector.broadcast %8 : vector<1x256xf32> to vector<64x256xf32>
    %10 = arith.addf %7, %9 : vector<64x256xf32>
    %c0_11 = arith.constant 0 : index
    %c0_12 = arith.constant 0 : index
    %11 = vector.load %arg9[%c0_11, %c0_12] : memref<64x256xf32, #tpu.memory_space<vmem>>, vector<64x256xf32>
    tpu.vector_store %arg9[%c0_11, %c0_12], %10 {strides = array<i32>} : memref<64x256xf32, #tpu.memory_space<vmem>>, vector<64x256xf32>,
    %12 = tpu.iota {dimensions = array<i32: 1>} : vector<8x256xi32>
    %c128_i32 = arith.constant 128 : i32
    %13 = vector.broadcast %c128_i32 : i32 to vector<8x256xi32>
    %14 = arith.cmpi sge, %12, %13 : vector<8x256xi32>
    %c192_i32 = arith.constant 192 : i32
    %15 = vector.broadcast %c192_i32 : i32 to vector<8x256xi32>
    %16 = arith.cmpi slt, %12, %15 : vector<8x256xi32>
    %17 = arith.andi %14, %16 : vector<8x256xi1>
    %cst_13 = arith.constant 0.000000e+00 : f32
    %18 = vector.broadcast %cst_13 : f32 to vector<8x64xf32>
    %c0_i32 = arith.constant 0 : i32
    %c8_i32 = arith.constant 8 : i32
    %19 = arith.muli %c0_i32, %c8_i32 : i32
    %20 = tpu.assume_multiple %19, 8 : i32
    %21 = arith.index_cast %20 : i32 to index
    %c0_14 = arith.constant 0 : index
    %22 = vector.load %arg9[%21, %c0_14] : memref<64x256xf32, #tpu.memory_space<vmem>>, vector<8x256xf32>
    %cst_15 = arith.constant dense<0.000000e+00> : vector<8x256xf32>
    %23 = tpu.matmul %18, %0, %cst_15 {dimension_numbers = #tpu.dot_dimension_numbers<[1], [0], [0], [1], [0, 0, 1, 1], [], []>} : vector<8x64xf32>, vector<64x256xf32>, vector<8x256xf32> -> vector<8x256xf32>
    %24 = arith.addf %22, %23 : vector<8x256xf32>
    %25 = math.tanh %24 : vector<8x256xf32>
    %26 = arith.negf %24 : vector<8x256xf32>
    %27 = math.exp %26 : vector<8x256xf32>
    %cst_16 = arith.constant 1.000000e+00 : f32
    %28 = vector.broadcast %cst_16 : f32 to vector<8x256xf32>
    %29 = arith.addf %28, %27 : vector<8x256xf32>
    %30 = arith.divf %28, %29 : vector<8x256xf32>
    %31 = arith.select %17, %25, %30 : vector<8x256xi1>, vector<8x256xf32>
    %32 = vector.extract_strided_slice %31 {offsets = [0, 0], sizes = [8, 64], strides = [1, 1]} : vector<8x256xf32> to vector<8x64xf32>
    %33 = vector.extract_strided_slice %31 {offsets = [0, 64], sizes = [8, 64], strides = [1, 1]} : vector<8x256xf32> to vector<8x64xf32>
    %34 = vector.extract_strided_slice %31 {offsets = [0, 128], sizes = [8, 64], strides = [1, 1]} : vector<8x256xf32> to vector<8x64xf32>
    %35 = vector.extract_strided_slice %31 {offsets = [0, 192], sizes = [8, 64], strides = [1, 1]} : vector<8x256xf32> to vector<8x64xf32>
    %36 = arith.mulf %33, %18 : vector<8x64xf32>
    %37 = arith.mulf %32, %34 : vector<8x64xf32>
    %38 = arith.addf %36, %37 : vector<8x64xf32>
    %39 = math.tanh %38 : vector<8x64xf32>
    %40 = arith.mulf %35, %39 : vector<8x64xf32>
    %41 = tpu.concatenate %40, %18 in 1 : vector<8x64xf32>, vector<8x64xf32> -> vector<8x128xf32>
    %cst_17 = arith.constant dense<0.000000e+00> : vector<8x256xf32>
    %42 = tpu.matmul %41, %1, %cst_17 {dimension_numbers = #tpu.dot_dimension_numbers<[1], [0], [0], [1], [0, 0, 1, 1], [], []>} : vector<8x128xf32>, vector<128x256xf32>, vector<8x256xf32> -> vector<8x256xf32>
    %43 = arith.addf %42, %4 : vector<8x256xf32>
    %44 = math.tanh %43 : vector<8x256xf32>
    %45 = arith.negf %43 : vector<8x256xf32>
    %46 = math.exp %45 : vector<8x256xf32>
    %cst_18 = arith.constant 1.000000e+00 : f32
    %47 = vector.broadcast %cst_18 : f32 to vector<8x256xf32>
    %48 = arith.addf %47, %46 : vector<8x256xf32>
    %49 = arith.divf %47, %48 : vector<8x256xf32>
    %50 = arith.select %17, %44, %49 : vector<8x256xi1>, vector<8x256xf32>
    %51 = vector.extract_strided_slice %50 {offsets = [0, 0], sizes = [8, 64], strides = [1, 1]} : vector<8x256xf32> to vector<8x64xf32>
    %52 = vector.extract_strided_slice %50 {offsets = [0, 64], sizes = [8, 64], strides = [1, 1]} : vector<8x256xf32> to vector<8x64xf32>
    %53 = vector.extract_strided_slice %50 {offsets = [0, 128], sizes = [8, 64], strides = [1, 1]} : vector<8x256xf32> to vector<8x64xf32>
    %54 = vector.extract_strided_slice %50 {offsets = [0, 192], sizes = [8, 64], strides = [1, 1]} : vector<8x256xf32> to vector<8x64xf32>
    %55 = arith.mulf %52, %18 : vector<8x64xf32>
    %56 = arith.mulf %51, %53 : vector<8x64xf32>
    %57 = arith.addf %55, %56 : vector<8x64xf32>
    %58 = math.tanh %57 : vector<8x64xf32>
    %59 = arith.mulf %54, %58 : vector<8x64xf32>
    %c1_i32 = arith.constant 1 : i32
    %c8_i32_19 = arith.constant 8 : i32
    %60 = arith.muli %c1_i32, %c8_i32_19 : i32
    %61 = tpu.assume_multiple %60, 8 : i32
    %62 = arith.index_cast %61 : i32 to index
    %c0_20 = arith.constant 0 : index
    %63 = vector.load %arg9[%62, %c0_20] : memref<64x256xf32, #tpu.memory_space<vmem>>, vector<8x256xf32>
    %cst_21 = arith.constant dense<0.000000e+00> : vector<8x256xf32>
    %64 = tpu.matmul %40, %0, %cst_21 {dimension_numbers = #tpu.dot_dimension_numbers<[1], [0], [0], [1], [0, 0, 1, 1], [], []>} : vector<8x64xf32>, vector<64x256xf32>, vector<8x256xf32> -> vector<8x256xf32>
    %65 = arith.addf %63, %64 : vector<8x256xf32>
    %66 = math.tanh %65 : vector<8x256xf32>
    %67 = arith.negf %65 : vector<8x256xf32>
    %68 = math.exp %67 : vector<8x256xf32>
    %cst_22 = arith.constant 1.000000e+00 : f32
    %69 = vector.broadcast %cst_22 : f32 to vector<8x256xf32>
    %70 = arith.addf %69, %68 : vector<8x256xf32>
    %71 = arith.divf %69, %70 : vector<8x256xf32>
    %72 = arith.select %17, %66, %71 : vector<8x256xi1>, vector<8x256xf32>
    %73 = vector.extract_strided_slice %72 {offsets = [0, 0], sizes = [8, 64], strides = [1, 1]} : vector<8x256xf32> to vector<8x64xf32>
    %74 = vector.extract_strided_slice %72 {offsets = [0, 64], sizes = [8, 64], strides = [1, 1]} : vector<8x256xf32> to vector<8x64xf32>
    %75 = vector.extract_strided_slice %72 {offsets = [0, 128], sizes = [8, 64], strides = [1, 1]} : vector<8x256xf32> to vector<8x64xf32>
    %76 = vector.extract_strided_slice %72 {offsets = [0, 192], sizes = [8, 64], strides = [1, 1]} : vector<8x256xf32> to vector<8x64xf32>
    %77 = arith.mulf %74, %38 : vector<8x64xf32>
    %78 = arith.mulf %73, %75 : vector<8x64xf32>
    %79 = arith.addf %77, %78 : vector<8x64xf32>
    %80 = math.tanh %79 : vector<8x64xf32>
    %81 = arith.mulf %76, %80 : vector<8x64xf32>
    %82 = tpu.concatenate %81, %59 in 1 : vector<8x64xf32>, vector<8x64xf32> -> vector<8x128xf32>
    %cst_23 = arith.constant dense<0.000000e+00> : vector<8x256xf32>
    %83 = tpu.matmul %82, %1, %cst_23 {dimension_numbers = #tpu.dot_dimension_numbers<[1], [0], [0], [1], [0, 0, 1, 1], [], []>} : vector<8x128xf32>, vector<128x256xf32>, vector<8x256xf32> -> vector<8x256xf32>
    %84 = arith.addf %83, %4 : vector<8x256xf32>
    %85 = math.tanh %84 : vector<8x256xf32>
    %86 = arith.negf %84 : vector<8x256xf32>
    %87 = math.exp %86 : vector<8x256xf32>
    %cst_24 = arith.constant 1.000000e+00 : f32
    %88 = vector.broadcast %cst_24 : f32 to vector<8x256xf32>
    %89 = arith.addf %88, %87 : vector<8x256xf32>
    %90 = arith.divf %88, %89 : vector<8x256xf32>
    %91 = arith.select %17, %85, %90 : vector<8x256xi1>, vector<8x256xf32>
    %92 = vector.extract_strided_slice %91 {offsets = [0, 0], sizes = [8, 64], strides = [1, 1]} : vector<8x256xf32> to vector<8x64xf32>
    %93 = vector.extract_strided_slice %91 {offsets = [0, 64], sizes = [8, 64], strides = [1, 1]} : vector<8x256xf32> to vector<8x64xf32>
    %94 = vector.extract_strided_slice %91 {offsets = [0, 128], sizes = [8, 64], strides = [1, 1]} : vector<8x256xf32> to vector<8x64xf32>
    %95 = vector.extract_strided_slice %91 {offsets = [0, 192], sizes = [8, 64], strides = [1, 1]} : vector<8x256xf32> to vector<8x64xf32>
    %96 = arith.mulf %93, %57 : vector<8x64xf32>
    %97 = arith.mulf %92, %94 : vector<8x64xf32>
    %98 = arith.addf %96, %97 : vector<8x64xf32>
    %99 = math.tanh %98 : vector<8x64xf32>
    %100 = arith.mulf %95, %99 : vector<8x64xf32>
    %c2_i32 = arith.constant 2 : i32
    %c8_i32_25 = arith.constant 8 : i32
    %101 = arith.muli %c2_i32, %c8_i32_25 : i32
    %102 = tpu.assume_multiple %101, 8 : i32
    %103 = arith.index_cast %102 : i32 to index
    %c0_26 = arith.constant 0 : index
    %104 = vector.load %arg9[%103, %c0_26] : memref<64x256xf32, #tpu.memory_space<vmem>>, vector<8x256xf32>
    %cst_27 = arith.constant dense<0.000000e+00> : vector<8x256xf32>
    %105 = tpu.matmul %81, %0, %cst_27 {dimension_numbers = #tpu.dot_dimension_numbers<[1], [0], [0], [1], [0, 0, 1, 1], [], []>} : vector<8x64xf32>, vector<64x256xf32>, vector<8x256xf32> -> vector<8x256xf32>
    %106 = arith.addf %104, %105 : vector<8x256xf32>
    %107 = math.tanh %106 : vector<8x256xf32>
    %108 = arith.negf %106 : vector<8x256xf32>
    %109 = math.exp %108 : vector<8x256xf32>
    %cst_28 = arith.constant 1.000000e+00 : f32
    %110 = vector.broadcast %cst_28 : f32 to vector<8x256xf32>
    %111 = arith.addf %110, %109 : vector<8x256xf32>
    %112 = arith.divf %110, %111 : vector<8x256xf32>
    %113 = arith.select %17, %107, %112 : vector<8x256xi1>, vector<8x256xf32>
    %114 = vector.extract_strided_slice %113 {offsets = [0, 0], sizes = [8, 64], strides = [1, 1]} : vector<8x256xf32> to vector<8x64xf32>
    %115 = vector.extract_strided_slice %113 {offsets = [0, 64], sizes = [8, 64], strides = [1, 1]} : vector<8x256xf32> to vector<8x64xf32>
    %116 = vector.extract_strided_slice %113 {offsets = [0, 128], sizes = [8, 64], strides = [1, 1]} : vector<8x256xf32> to vector<8x64xf32>
    %117 = vector.extract_strided_slice %113 {offsets = [0, 192], sizes = [8, 64], strides = [1, 1]} : vector<8x256xf32> to vector<8x64xf32>
    %118 = arith.mulf %115, %79 : vector<8x64xf32>
    %119 = arith.mulf %114, %116 : vector<8x64xf32>
    %120 = arith.addf %118, %119 : vector<8x64xf32>
    %121 = math.tanh %120 : vector<8x64xf32>
    %122 = arith.mulf %117, %121 : vector<8x64xf32>
    %123 = tpu.concatenate %122, %100 in 1 : vector<8x64xf32>, vector<8x64xf32> -> vector<8x128xf32>
    %cst_29 = arith.constant dense<0.000000e+00> : vector<8x256xf32>
    %124 = tpu.matmul %123, %1, %cst_29 {dimension_numbers = #tpu.dot_dimension_numbers<[1], [0], [0], [1], [0, 0, 1, 1], [], []>} : vector<8x128xf32>, vector<128x256xf32>, vector<8x256xf32> -> vector<8x256xf32>
    %125 = arith.addf %124, %4 : vector<8x256xf32>
    %126 = math.tanh %125 : vector<8x256xf32>
    %127 = arith.negf %125 : vector<8x256xf32>
    %128 = math.exp %127 : vector<8x256xf32>
    %cst_30 = arith.constant 1.000000e+00 : f32
    %129 = vector.broadcast %cst_30 : f32 to vector<8x256xf32>
    %130 = arith.addf %129, %128 : vector<8x256xf32>
    %131 = arith.divf %129, %130 : vector<8x256xf32>
    %132 = arith.select %17, %126, %131 : vector<8x256xi1>, vector<8x256xf32>
    %133 = vector.extract_strided_slice %132 {offsets = [0, 0], sizes = [8, 64], strides = [1, 1]} : vector<8x256xf32> to vector<8x64xf32>
    %134 = vector.extract_strided_slice %132 {offsets = [0, 64], sizes = [8, 64], strides = [1, 1]} : vector<8x256xf32> to vector<8x64xf32>
    %135 = vector.extract_strided_slice %132 {offsets = [0, 128], sizes = [8, 64], strides = [1, 1]} : vector<8x256xf32> to vector<8x64xf32>
    %136 = vector.extract_strided_slice %132 {offsets = [0, 192], sizes = [8, 64], strides = [1, 1]} : vector<8x256xf32> to vector<8x64xf32>
    %137 = arith.mulf %134, %98 : vector<8x64xf32>
    %138 = arith.mulf %133, %135 : vector<8x64xf32>
    %139 = arith.addf %137, %138 : vector<8x64xf32>
    %140 = math.tanh %139 : vector<8x64xf32>
    %141 = arith.mulf %136, %140 : vector<8x64xf32>
    %c3_i32 = arith.constant 3 : i32
    %c8_i32_31 = arith.constant 8 : i32
    %142 = arith.muli %c3_i32, %c8_i32_31 : i32
    %143 = tpu.assume_multiple %142, 8 : i32
    %144 = arith.index_cast %143 : i32 to index
    %c0_32 = arith.constant 0 : index
    %145 = vector.load %arg9[%144, %c0_32] : memref<64x256xf32, #tpu.memory_space<vmem>>, vector<8x256xf32>
    %cst_33 = arith.constant dense<0.000000e+00> : vector<8x256xf32>
    %146 = tpu.matmul %122, %0, %cst_33 {dimension_numbers = #tpu.dot_dimension_numbers<[1], [0], [0], [1], [0, 0, 1, 1], [], []>} : vector<8x64xf32>, vector<64x256xf32>, vector<8x256xf32> -> vector<8x256xf32>
    %147 = arith.addf %145, %146 : vector<8x256xf32>
    %148 = math.tanh %147 : vector<8x256xf32>
    %149 = arith.negf %147 : vector<8x256xf32>
    %150 = math.exp %149 : vector<8x256xf32>
    %cst_34 = arith.constant 1.000000e+00 : f32
    %151 = vector.broadcast %cst_34 : f32 to vector<8x256xf32>
    %152 = arith.addf %151, %150 : vector<8x256xf32>
    %153 = arith.divf %151, %152 : vector<8x256xf32>
    %154 = arith.select %17, %148, %153 : vector<8x256xi1>, vector<8x256xf32>
    %155 = vector.extract_strided_slice %154 {offsets = [0, 0], sizes = [8, 64], strides = [1, 1]} : vector<8x256xf32> to vector<8x64xf32>
    %156 = vector.extract_strided_slice %154 {offsets = [0, 64], sizes = [8, 64], strides = [1, 1]} : vector<8x256xf32> to vector<8x64xf32>
    %157 = vector.extract_strided_slice %154 {offsets = [0, 128], sizes = [8, 64], strides = [1, 1]} : vector<8x256xf32> to vector<8x64xf32>
    %158 = vector.extract_strided_slice %154 {offsets = [0, 192], sizes = [8, 64], strides = [1, 1]} : vector<8x256xf32> to vector<8x64xf32>
    %159 = arith.mulf %156, %120 : vector<8x64xf32>
    %160 = arith.mulf %155, %157 : vector<8x64xf32>
    %161 = arith.addf %159, %160 : vector<8x64xf32>
    %162 = math.tanh %161 : vector<8x64xf32>
    %163 = arith.mulf %158, %162 : vector<8x64xf32>
    %164 = tpu.concatenate %163, %141 in 1 : vector<8x64xf32>, vector<8x64xf32> -> vector<8x128xf32>
    %cst_35 = arith.constant dense<0.000000e+00> : vector<8x256xf32>
    %165 = tpu.matmul %164, %1, %cst_35 {dimension_numbers = #tpu.dot_dimension_numbers<[1], [0], [0], [1], [0, 0, 1, 1], [], []>} : vector<8x128xf32>, vector<128x256xf32>, vector<8x256xf32> -> vector<8x256xf32>
    %166 = arith.addf %165, %4 : vector<8x256xf32>
    %167 = math.tanh %166 : vector<8x256xf32>
    %168 = arith.negf %166 : vector<8x256xf32>
    %169 = math.exp %168 : vector<8x256xf32>
    %cst_36 = arith.constant 1.000000e+00 : f32
    %170 = vector.broadcast %cst_36 : f32 to vector<8x256xf32>
    %171 = arith.addf %170, %169 : vector<8x256xf32>
    %172 = arith.divf %170, %171 : vector<8x256xf32>
    %173 = arith.select %17, %167, %172 : vector<8x256xi1>, vector<8x256xf32>
    %174 = vector.extract_strided_slice %173 {offsets = [0, 0], sizes = [8, 64], strides = [1, 1]} : vector<8x256xf32> to vector<8x64xf32>
    %175 = vector.extract_strided_slice %173 {offsets = [0, 64], sizes = [8, 64], strides = [1, 1]} : vector<8x256xf32> to vector<8x64xf32>
    %176 = vector.extract_strided_slice %173 {offsets = [0, 128], sizes = [8, 64], strides = [1, 1]} : vector<8x256xf32> to vector<8x64xf32>
    %177 = vector.extract_strided_slice %173 {offsets = [0, 192], sizes = [8, 64], strides = [1, 1]} : vector<8x256xf32> to vector<8x64xf32>
    %178 = arith.mulf %175, %139 : vector<8x64xf32>
    %179 = arith.mulf %174, %176 : vector<8x64xf32>
    %180 = arith.addf %178, %179 : vector<8x64xf32>
    %181 = math.tanh %180 : vector<8x64xf32>
    %182 = arith.mulf %177, %181 : vector<8x64xf32>
    %c4_i32 = arith.constant 4 : i32
    %c8_i32_37 = arith.constant 8 : i32
    %183 = arith.muli %c4_i32, %c8_i32_37 : i32
    %184 = tpu.assume_multiple %183, 8 : i32
    %185 = arith.index_cast %184 : i32 to index
    %c0_38 = arith.constant 0 : index
    %186 = vector.load %arg9[%185, %c0_38] : memref<64x256xf32, #tpu.memory_space<vmem>>, vector<8x256xf32>
    %cst_39 = arith.constant dense<0.000000e+00> : vector<8x256xf32>
    %187 = tpu.matmul %163, %0, %cst_39 {dimension_numbers = #tpu.dot_dimension_numbers<[1], [0], [0], [1], [0, 0, 1, 1], [], []>} : vector<8x64xf32>, vector<64x256xf32>, vector<8x256xf32> -> vector<8x256xf32>
    %188 = arith.addf %186, %187 : vector<8x256xf32>
    %189 = math.tanh %188 : vector<8x256xf32>
    %190 = arith.negf %188 : vector<8x256xf32>
    %191 = math.exp %190 : vector<8x256xf32>
    %cst_40 = arith.constant 1.000000e+00 : f32
    %192 = vector.broadcast %cst_40 : f32 to vector<8x256xf32>
    %193 = arith.addf %192, %191 : vector<8x256xf32>
    %194 = arith.divf %192, %193 : vector<8x256xf32>
    %195 = arith.select %17, %189, %194 : vector<8x256xi1>, vector<8x256xf32>
    %196 = vector.extract_strided_slice %195 {offsets = [0, 0], sizes = [8, 64], strides = [1, 1]} : vector<8x256xf32> to vector<8x64xf32>
    %197 = vector.extract_strided_slice %195 {offsets = [0, 64], sizes = [8, 64], strides = [1, 1]} : vector<8x256xf32> to vector<8x64xf32>
    %198 = vector.extract_strided_slice %195 {offsets = [0, 128], sizes = [8, 64], strides = [1, 1]} : vector<8x256xf32> to vector<8x64xf32>
    %199 = vector.extract_strided_slice %195 {offsets = [0, 192], sizes = [8, 64], strides = [1, 1]} : vector<8x256xf32> to vector<8x64xf32>
    %200 = arith.mulf %197, %161 : vector<8x64xf32>
    %201 = arith.mulf %196, %198 : vector<8x64xf32>
    %202 = arith.addf %200, %201 : vector<8x64xf32>
    %203 = math.tanh %202 : vector<8x64xf32>
    %204 = arith.mulf %199, %203 : vector<8x64xf32>
    %205 = tpu.concatenate %204, %182 in 1 : vector<8x64xf32>, vector<8x64xf32> -> vector<8x128xf32>
    %cst_41 = arith.constant dense<0.000000e+00> : vector<8x256xf32>
    %206 = tpu.matmul %205, %1, %cst_41 {dimension_numbers = #tpu.dot_dimension_numbers<[1], [0], [0], [1], [0, 0, 1, 1], [], []>} : vector<8x128xf32>, vector<128x256xf32>, vector<8x256xf32> -> vector<8x256xf32>
    %207 = arith.addf %206, %4 : vector<8x256xf32>
    %208 = math.tanh %207 : vector<8x256xf32>
    %209 = arith.negf %207 : vector<8x256xf32>
    %210 = math.exp %209 : vector<8x256xf32>
    %cst_42 = arith.constant 1.000000e+00 : f32
    %211 = vector.broadcast %cst_42 : f32 to vector<8x256xf32>
    %212 = arith.addf %211, %210 : vector<8x256xf32>
    %213 = arith.divf %211, %212 : vector<8x256xf32>
    %214 = arith.select %17, %208, %213 : vector<8x256xi1>, vector<8x256xf32>
    %215 = vector.extract_strided_slice %214 {offsets = [0, 0], sizes = [8, 64], strides = [1, 1]} : vector<8x256xf32> to vector<8x64xf32>
    %216 = vector.extract_strided_slice %214 {offsets = [0, 64], sizes = [8, 64], strides = [1, 1]} : vector<8x256xf32> to vector<8x64xf32>
    %217 = vector.extract_strided_slice %214 {offsets = [0, 128], sizes = [8, 64], strides = [1, 1]} : vector<8x256xf32> to vector<8x64xf32>
    %218 = vector.extract_strided_slice %214 {offsets = [0, 192], sizes = [8, 64], strides = [1, 1]} : vector<8x256xf32> to vector<8x64xf32>
    %219 = arith.mulf %216, %180 : vector<8x64xf32>
    %220 = arith.mulf %215, %217 : vector<8x64xf32>
    %221 = arith.addf %219, %220 : vector<8x64xf32>
    %222 = math.tanh %221 : vector<8x64xf32>
    %223 = arith.mulf %218, %222 : vector<8x64xf32>
    %c5_i32 = arith.constant 5 : i32
    %c8_i32_43 = arith.constant 8 : i32
    %224 = arith.muli %c5_i32, %c8_i32_43 : i32
    %225 = tpu.assume_multiple %224, 8 : i32
    %226 = arith.index_cast %225 : i32 to index
    %c0_44 = arith.constant 0 : index
    %227 = vector.load %arg9[%226, %c0_44] : memref<64x256xf32, #tpu.memory_space<vmem>>, vector<8x256xf32>
    %cst_45 = arith.constant dense<0.000000e+00> : vector<8x256xf32>
    %228 = tpu.matmul %204, %0, %cst_45 {dimension_numbers = #tpu.dot_dimension_numbers<[1], [0], [0], [1], [0, 0, 1, 1], [], []>} : vector<8x64xf32>, vector<64x256xf32>, vector<8x256xf32> -> vector<8x256xf32>
    %229 = arith.addf %227, %228 : vector<8x256xf32>
    %230 = math.tanh %229 : vector<8x256xf32>
    %231 = arith.negf %229 : vector<8x256xf32>
    %232 = math.exp %231 : vector<8x256xf32>
    %cst_46 = arith.constant 1.000000e+00 : f32
    %233 = vector.broadcast %cst_46 : f32 to vector<8x256xf32>
    %234 = arith.addf %233, %232 : vector<8x256xf32>
    %235 = arith.divf %233, %234 : vector<8x256xf32>
    %236 = arith.select %17, %230, %235 : vector<8x256xi1>, vector<8x256xf32>
    %237 = vector.extract_strided_slice %236 {offsets = [0, 0], sizes = [8, 64], strides = [1, 1]} : vector<8x256xf32> to vector<8x64xf32>
    %238 = vector.extract_strided_slice %236 {offsets = [0, 64], sizes = [8, 64], strides = [1, 1]} : vector<8x256xf32> to vector<8x64xf32>
    %239 = vector.extract_strided_slice %236 {offsets = [0, 128], sizes = [8, 64], strides = [1, 1]} : vector<8x256xf32> to vector<8x64xf32>
    %240 = vector.extract_strided_slice %236 {offsets = [0, 192], sizes = [8, 64], strides = [1, 1]} : vector<8x256xf32> to vector<8x64xf32>
    %241 = arith.mulf %238, %202 : vector<8x64xf32>
    %242 = arith.mulf %237, %239 : vector<8x64xf32>
    %243 = arith.addf %241, %242 : vector<8x64xf32>
    %244 = math.tanh %243 : vector<8x64xf32>
    %245 = arith.mulf %240, %244 : vector<8x64xf32>
    %246 = tpu.concatenate %245, %223 in 1 : vector<8x64xf32>, vector<8x64xf32> -> vector<8x128xf32>
    %cst_47 = arith.constant dense<0.000000e+00> : vector<8x256xf32>
    %247 = tpu.matmul %246, %1, %cst_47 {dimension_numbers = #tpu.dot_dimension_numbers<[1], [0], [0], [1], [0, 0, 1, 1], [], []>} : vector<8x128xf32>, vector<128x256xf32>, vector<8x256xf32> -> vector<8x256xf32>
    %248 = arith.addf %247, %4 : vector<8x256xf32>
    %249 = math.tanh %248 : vector<8x256xf32>
    %250 = arith.negf %248 : vector<8x256xf32>
    %251 = math.exp %250 : vector<8x256xf32>
    %cst_48 = arith.constant 1.000000e+00 : f32
    %252 = vector.broadcast %cst_48 : f32 to vector<8x256xf32>
    %253 = arith.addf %252, %251 : vector<8x256xf32>
    %254 = arith.divf %252, %253 : vector<8x256xf32>
    %255 = arith.select %17, %249, %254 : vector<8x256xi1>, vector<8x256xf32>
    %256 = vector.extract_strided_slice %255 {offsets = [0, 0], sizes = [8, 64], strides = [1, 1]} : vector<8x256xf32> to vector<8x64xf32>
    %257 = vector.extract_strided_slice %255 {offsets = [0, 64], sizes = [8, 64], strides = [1, 1]} : vector<8x256xf32> to vector<8x64xf32>
    %258 = vector.extract_strided_slice %255 {offsets = [0, 128], sizes = [8, 64], strides = [1, 1]} : vector<8x256xf32> to vector<8x64xf32>
    %259 = vector.extract_strided_slice %255 {offsets = [0, 192], sizes = [8, 64], strides = [1, 1]} : vector<8x256xf32> to vector<8x64xf32>
    %260 = arith.mulf %257, %221 : vector<8x64xf32>
    %261 = arith.mulf %256, %258 : vector<8x64xf32>
    %262 = arith.addf %260, %261 : vector<8x64xf32>
    %263 = math.tanh %262 : vector<8x64xf32>
    %264 = arith.mulf %259, %263 : vector<8x64xf32>
    %c6_i32 = arith.constant 6 : i32
    %c8_i32_49 = arith.constant 8 : i32
    %265 = arith.muli %c6_i32, %c8_i32_49 : i32
    %266 = tpu.assume_multiple %265, 8 : i32
    %267 = arith.index_cast %266 : i32 to index
    %c0_50 = arith.constant 0 : index
    %268 = vector.load %arg9[%267, %c0_50] : memref<64x256xf32, #tpu.memory_space<vmem>>, vector<8x256xf32>
    %cst_51 = arith.constant dense<0.000000e+00> : vector<8x256xf32>
    %269 = tpu.matmul %245, %0, %cst_51 {dimension_numbers = #tpu.dot_dimension_numbers<[1], [0], [0], [1], [0, 0, 1, 1], [], []>} : vector<8x64xf32>, vector<64x256xf32>, vector<8x256xf32> -> vector<8x256xf32>
    %270 = arith.addf %268, %269 : vector<8x256xf32>
    %271 = math.tanh %270 : vector<8x256xf32>
    %272 = arith.negf %270 : vector<8x256xf32>
    %273 = math.exp %272 : vector<8x256xf32>
    %cst_52 = arith.constant 1.000000e+00 : f32
    %274 = vector.broadcast %cst_52 : f32 to vector<8x256xf32>
    %275 = arith.addf %274, %273 : vector<8x256xf32>
    %276 = arith.divf %274, %275 : vector<8x256xf32>
    %277 = arith.select %17, %271, %276 : vector<8x256xi1>, vector<8x256xf32>
    %278 = vector.extract_strided_slice %277 {offsets = [0, 0], sizes = [8, 64], strides = [1, 1]} : vector<8x256xf32> to vector<8x64xf32>
    %279 = vector.extract_strided_slice %277 {offsets = [0, 64], sizes = [8, 64], strides = [1, 1]} : vector<8x256xf32> to vector<8x64xf32>
    %280 = vector.extract_strided_slice %277 {offsets = [0, 128], sizes = [8, 64], strides = [1, 1]} : vector<8x256xf32> to vector<8x64xf32>
    %281 = vector.extract_strided_slice %277 {offsets = [0, 192], sizes = [8, 64], strides = [1, 1]} : vector<8x256xf32> to vector<8x64xf32>
    %282 = arith.mulf %279, %243 : vector<8x64xf32>
    %283 = arith.mulf %278, %280 : vector<8x64xf32>
    %284 = arith.addf %282, %283 : vector<8x64xf32>
    %285 = math.tanh %284 : vector<8x64xf32>
    %286 = arith.mulf %281, %285 : vector<8x64xf32>
    %287 = tpu.concatenate %286, %264 in 1 : vector<8x64xf32>, vector<8x64xf32> -> vector<8x128xf32>
    %cst_53 = arith.constant dense<0.000000e+00> : vector<8x256xf32>
    %288 = tpu.matmul %287, %1, %cst_53 {dimension_numbers = #tpu.dot_dimension_numbers<[1], [0], [0], [1], [0, 0, 1, 1], [], []>} : vector<8x128xf32>, vector<128x256xf32>, vector<8x256xf32> -> vector<8x256xf32>
    %289 = arith.addf %288, %4 : vector<8x256xf32>
    %290 = math.tanh %289 : vector<8x256xf32>
    %291 = arith.negf %289 : vector<8x256xf32>
    %292 = math.exp %291 : vector<8x256xf32>
    %cst_54 = arith.constant 1.000000e+00 : f32
    %293 = vector.broadcast %cst_54 : f32 to vector<8x256xf32>
    %294 = arith.addf %293, %292 : vector<8x256xf32>
    %295 = arith.divf %293, %294 : vector<8x256xf32>
    %296 = arith.select %17, %290, %295 : vector<8x256xi1>, vector<8x256xf32>
    %297 = vector.extract_strided_slice %296 {offsets = [0, 0], sizes = [8, 64], strides = [1, 1]} : vector<8x256xf32> to vector<8x64xf32>
    %298 = vector.extract_strided_slice %296 {offsets = [0, 64], sizes = [8, 64], strides = [1, 1]} : vector<8x256xf32> to vector<8x64xf32>
    %299 = vector.extract_strided_slice %296 {offsets = [0, 128], sizes = [8, 64], strides = [1, 1]} : vector<8x256xf32> to vector<8x64xf32>
    %300 = vector.extract_strided_slice %296 {offsets = [0, 192], sizes = [8, 64], strides = [1, 1]} : vector<8x256xf32> to vector<8x64xf32>
    %301 = arith.mulf %298, %262 : vector<8x64xf32>
    %302 = arith.mulf %297, %299 : vector<8x64xf32>
    %303 = arith.addf %301, %302 : vector<8x64xf32>
    %304 = math.tanh %303 : vector<8x64xf32>
    %305 = arith.mulf %300, %304 : vector<8x64xf32>
    %c7_i32 = arith.constant 7 : i32
    %c8_i32_55 = arith.constant 8 : i32
    %306 = arith.muli %c7_i32, %c8_i32_55 : i32
    %307 = tpu.assume_multiple %306, 8 : i32
    %308 = arith.index_cast %307 : i32 to index
    %c0_56 = arith.constant 0 : index
    %309 = vector.load %arg9[%308, %c0_56] : memref<64x256xf32, #tpu.memory_space<vmem>>, vector<8x256xf32>
    %cst_57 = arith.constant dense<0.000000e+00> : vector<8x256xf32>
    %310 = tpu.matmul %286, %0, %cst_57 {dimension_numbers = #tpu.dot_dimension_numbers<[1], [0], [0], [1], [0, 0, 1, 1], [], []>} : vector<8x64xf32>, vector<64x256xf32>, vector<8x256xf32> -> vector<8x256xf32>
    %311 = arith.addf %309, %310 : vector<8x256xf32>
    %312 = math.tanh %311 : vector<8x256xf32>
    %313 = arith.negf %311 : vector<8x256xf32>
    %314 = math.exp %313 : vector<8x256xf32>
    %cst_58 = arith.constant 1.000000e+00 : f32
    %315 = vector.broadcast %cst_58 : f32 to vector<8x256xf32>
    %316 = arith.addf %315, %314 : vector<8x256xf32>
    %317 = arith.divf %315, %316 : vector<8x256xf32>
    %318 = arith.select %17, %312, %317 : vector<8x256xi1>, vector<8x256xf32>
    %319 = vector.extract_strided_slice %318 {offsets = [0, 0], sizes = [8, 64], strides = [1, 1]} : vector<8x256xf32> to vector<8x64xf32>
    %320 = vector.extract_strided_slice %318 {offsets = [0, 64], sizes = [8, 64], strides = [1, 1]} : vector<8x256xf32> to vector<8x64xf32>
    %321 = vector.extract_strided_slice %318 {offsets = [0, 128], sizes = [8, 64], strides = [1, 1]} : vector<8x256xf32> to vector<8x64xf32>
    %322 = vector.extract_strided_slice %318 {offsets = [0, 192], sizes = [8, 64], strides = [1, 1]} : vector<8x256xf32> to vector<8x64xf32>
    %323 = arith.mulf %320, %284 : vector<8x64xf32>
    %324 = arith.mulf %319, %321 : vector<8x64xf32>
    %325 = arith.addf %323, %324 : vector<8x64xf32>
    %326 = math.tanh %325 : vector<8x64xf32>
    %327 = arith.mulf %322, %326 : vector<8x64xf32>
    %328 = tpu.concatenate %327, %305 in 1 : vector<8x64xf32>, vector<8x64xf32> -> vector<8x128xf32>
    %cst_59 = arith.constant dense<0.000000e+00> : vector<8x256xf32>
    %329 = tpu.matmul %328, %1, %cst_59 {dimension_numbers = #tpu.dot_dimension_numbers<[1], [0], [0], [1], [0, 0, 1, 1], [], []>} : vector<8x128xf32>, vector<128x256xf32>, vector<8x256xf32> -> vector<8x256xf32>
    %330 = arith.addf %329, %4 : vector<8x256xf32>
    %331 = math.tanh %330 : vector<8x256xf32>
    %332 = arith.negf %330 : vector<8x256xf32>
    %333 = math.exp %332 : vector<8x256xf32>
    %cst_60 = arith.constant 1.000000e+00 : f32
    %334 = vector.broadcast %cst_60 : f32 to vector<8x256xf32>
    %335 = arith.addf %334, %333 : vector<8x256xf32>
    %336 = arith.divf %334, %335 : vector<8x256xf32>
    %337 = arith.select %17, %331, %336 : vector<8x256xi1>, vector<8x256xf32>
    %338 = vector.extract_strided_slice %337 {offsets = [0, 0], sizes = [8, 64], strides = [1, 1]} : vector<8x256xf32> to vector<8x64xf32>
    %339 = vector.extract_strided_slice %337 {offsets = [0, 64], sizes = [8, 64], strides = [1, 1]} : vector<8x256xf32> to vector<8x64xf32>
    %340 = vector.extract_strided_slice %337 {offsets = [0, 128], sizes = [8, 64], strides = [1, 1]} : vector<8x256xf32> to vector<8x64xf32>
    %341 = vector.extract_strided_slice %337 {offsets = [0, 192], sizes = [8, 64], strides = [1, 1]} : vector<8x256xf32> to vector<8x64xf32>
    %342 = arith.mulf %339, %303 : vector<8x64xf32>
    %343 = arith.mulf %338, %340 : vector<8x64xf32>
    %344 = arith.addf %342, %343 : vector<8x64xf32>
    %345 = math.tanh %344 : vector<8x64xf32>
    %346 = arith.mulf %341, %345 : vector<8x64xf32>
    %c8_i32_61 = arith.constant 8 : i32
    %c0_62 = arith.constant 0 : index
    %c0_63 = arith.constant 0 : index
    %347 = vector.load %arg6[%c0_62, %c0_63] : memref<64x128xf32, #tpu.memory_space<vmem>>, vector<64x128xf32>
    %cst_64 = arith.constant dense<0.000000e+00> : vector<8x128xf32>
    %348 = tpu.matmul %346, %347, %cst_64 {dimension_numbers = #tpu.dot_dimension_numbers<[1], [0], [0], [1], [0, 0, 1, 1], [], []>} : vector<8x64xf32>, vector<64x128xf32>, vector<8x128xf32> -> vector<8x128xf32>
    %c0_65 = arith.constant 0 : index
    %c0_66 = arith.constant 0 : index
    %349 = vector.load %arg7[%c0_65, %c0_66] : memref<1x128xf32, #tpu.memory_space<vmem>>, vector<1x128xf32>
    %350 = vector.broadcast %349 : vector<1x128xf32> to vector<8x128xf32>
    %351 = arith.addf %348, %350 : vector<8x128xf32>
    %c0_67 = arith.constant 0 : index
    %c0_68 = arith.constant 0 : index
    %352 = vector.load %arg8[%c0_67, %c0_68] : memref<8x128xf32, #tpu.memory_space<vmem>>, vector<8x128xf32>
    tpu.vector_store %arg8[%c0_67, %c0_68], %351 {strides = array<i32>} : memref<8x128xf32, #tpu.memory_space<vmem>>, vector<8x128xf32>,
    return
  }
}

</mosaic_0001>

<llo_original>
// kernel: lstm_model_forward.1
$region0: #{lstm_model_forward.1}
  #allocation0 [shape = 'u32[]', space=smem, size = 0x4, offset = 0x4, fixed_abs, tag = 'smem constant byte address 0x4 - core index']
  #allocation1 [shape = 'u32[144,128]{1,0:T(1,128)}', space=vmem, size = 0x12000, scoped, tag = 'internal scratch']
  #allocation2 [shape = 'f32[64,256]{1,0:T(8,128)}', space=vmem, size = 0x10000, scoped, tag = 'scratch operand']
  %s0 = inlined_call_operand.vmem [shape: f32[64,8], index: 0, kind: input, shape index: {}]
  %s1 = inlined_call_operand.vmem [shape: f32[8,256], index: 1, kind: input, shape index: {}]
  %s2 = inlined_call_operand.vmem [shape: f32[64,256], index: 2, kind: input, shape index: {}]
  %s3 = inlined_call_operand.vmem [shape: f32[1,256], index: 3, kind: input, shape index: {}]
  %s4 = inlined_call_operand.vmem [shape: f32[128,256], index: 4, kind: input, shape index: {}]
  %s5 = inlined_call_operand.vmem [shape: f32[1,256], index: 5, kind: input, shape index: {}]
  %s6 = inlined_call_operand.vmem [shape: f32[64,128], index: 6, kind: input, shape index: {}]
  %s7 = inlined_call_operand.vmem [shape: f32[1,128], index: 7, kind: input, shape index: {}]
  %s8 = inlined_call_operand.vmem [shape: f32[8,128], index: 8, kind: output, shape index: {}]
  %s9 = sld [smem:[#allocation0]]
  $region42: #{lstm_model_forward.1} parent=0
    _
  %s11 = ssub.s32 1, %s9
  %s12 = scalar_select 0, %s11, %s9
  // Predicated region
  $region2: #{lstm_model_forward.1} parent=0 // pred_check
    _
  $region3: #{lstm_model_forward.1} parent=0 // pred_check_branch
    %14 = sbr.rel (0) target = $region5
  $region4: #{lstm_model_forward.1} parent=0 // pred_region
    _
  $region5: #{lstm_model_forward.1} parent=0 // pred_fallthru
    _
  // Predicated region
  $region6: #{lstm_model_forward.1} parent=0 // pred_check
    _
  $region7: #{lstm_model_forward.1} parent=0 // pred_check_branch
    %16 = sbr.rel (0) target = $region9
  $region8: #{lstm_model_forward.1} parent=0 // pred_region
    _
  $region9: #{lstm_model_forward.1} parent=0 // pred_fallthru
    _
  // Predicated region
  $region10: #{lstm_model_forward.1} parent=0 // pred_check
    _
  $region11: #{lstm_model_forward.1} parent=0 // pred_check_branch
    %18 = sbr.rel (0) target = $region13
  $region12: #{lstm_model_forward.1} parent=0 // pred_region
    _
  $region13: #{lstm_model_forward.1} parent=0 // pred_fallthru
    _
  // Predicated region
  $region14: #{lstm_model_forward.1} parent=0 // pred_check
    _
  $region15: #{lstm_model_forward.1} parent=0 // pred_check_branch
    %20 = sbr.rel (0) target = $region17
  $region16: #{lstm_model_forward.1} parent=0 // pred_region
    _
  $region17: #{lstm_model_forward.1} parent=0 // pred_fallthru
    _
  // Predicated region
  $region18: #{lstm_model_forward.1} parent=0 // pred_check
    _
  $region19: #{lstm_model_forward.1} parent=0 // pred_check_branch
    %22 = sbr.rel (0) target = $region21
  $region20: #{lstm_model_forward.1} parent=0 // pred_region
    _
  $region21: #{lstm_model_forward.1} parent=0 // pred_fallthru
    _
  // Predicated region
  $region22: #{lstm_model_forward.1} parent=0 // pred_check
    _
  $region23: #{lstm_model_forward.1} parent=0 // pred_check_branch
    %24 = sbr.rel (0) target = $region25
  $region24: #{lstm_model_forward.1} parent=0 // pred_region
    _
  $region25: #{lstm_model_forward.1} parent=0 // pred_fallthru
    _
  // Predicated region
  $region26: #{lstm_model_forward.1} parent=0 // pred_check
    _
  $region27: #{lstm_model_forward.1} parent=0 // pred_check_branch
    %26 = sbr.rel (0) target = $region29
  $region28: #{lstm_model_forward.1} parent=0 // pred_region
    _
  $region29: #{lstm_model_forward.1} parent=0 // pred_fallthru
    _
  // Predicated region
  $region30: #{lstm_model_forward.1} parent=0 // pred_check
    _
  $region31: #{lstm_model_forward.1} parent=0 // pred_check_branch
    %28 = sbr.rel (0) target = $region33
  $region32: #{lstm_model_forward.1} parent=0 // pred_region
    _
  $region33: #{lstm_model_forward.1} parent=0 // pred_fallthru
    _
  %v29 = vld [vmem:[%s2] sm:$0xff]
  %v30 = vld [vmem:[%s2 + $0x8] sm:$0xff]
  %v31 = vld [vmem:[%s2 + $0x10] sm:$0xff]
  %v32 = vld [vmem:[%s2 + $0x18] sm:$0xff]
  %v33 = vld [vmem:[%s2 + $0x20] sm:$0xff]
  %v34 = vld [vmem:[%s2 + $0x28] sm:$0xff]
  %v35 = vld [vmem:[%s2 + $0x30] sm:$0xff]
  %v36 = vld [vmem:[%s2 + $0x38] sm:$0xff]
  %v37 = vld [vmem:[%s2 + $0x40] sm:$0xff]
  %v38 = vld [vmem:[%s2 + $0x48] sm:$0xff]
  %v39 = vld [vmem:[%s2 + $0x50] sm:$0xff]
  %v40 = vld [vmem:[%s2 + $0x58] sm:$0xff]
  %v41 = vld [vmem:[%s2 + $0x60] sm:$0xff]
  %v42 = vld [vmem:[%s2 + $0x68] sm:$0xff]
  %v43 = vld [vmem:[%s2 + $0x70] sm:$0xff]
  %v44 = vld [vmem:[%s2 + $0x78] sm:$0xff]
  %v45 = vld [vmem:[%s4] sm:$0xff]
  %v46 = vld [vmem:[%s4 + $0x8] sm:$0xff]
  %v47 = vld [vmem:[%s4 + $0x10] sm:$0xff]
  %v48 = vld [vmem:[%s4 + $0x18] sm:$0xff]
  %v49 = vld [vmem:[%s4 + $0x20] sm:$0xff]
  %v50 = vld [vmem:[%s4 + $0x28] sm:$0xff]
  %v51 = vld [vmem:[%s4 + $0x30] sm:$0xff]
  %v52 = vld [vmem:[%s4 + $0x38] sm:$0xff]
  %v53 = vld [vmem:[%s4 + $0x40] sm:$0xff]
  %v54 = vld [vmem:[%s4 + $0x48] sm:$0xff]
  %v55 = vld [vmem:[%s4 + $0x50] sm:$0xff]
  %v56 = vld [vmem:[%s4 + $0x58] sm:$0xff]
  %v57 = vld [vmem:[%s4 + $0x60] sm:$0xff]
  %v58 = vld [vmem:[%s4 + $0x68] sm:$0xff]
  %v59 = vld [vmem:[%s4 + $0x70] sm:$0xff]
  %v60 = vld [vmem:[%s4 + $0x78] sm:$0xff]
  %v61 = vld [vmem:[%s4 + $0x80] sm:$0xff]
  %v62 = vld [vmem:[%s4 + $0x88] sm:$0xff]
  %v63 = vld [vmem:[%s4 + $0x90] sm:$0xff]
  %v64 = vld [vmem:[%s4 + $0x98] sm:$0xff]
  %v65 = vld [vmem:[%s4 + $0xa0] sm:$0xff]
  %v66 = vld [vmem:[%s4 + $0xa8] sm:$0xff]
  %v67 = vld [vmem:[%s4 + $0xb0] sm:$0xff]
  %v68 = vld [vmem:[%s4 + $0xb8] sm:$0xff]
  %v69 = vld [vmem:[%s4 + $0xc0] sm:$0xff]
  %v70 = vld [vmem:[%s4 + $0xc8] sm:$0xff]
  %v71 = vld [vmem:[%s4 + $0xd0] sm:$0xff]
  %v72 = vld [vmem:[%s4 + $0xd8] sm:$0xff]
  %v73 = vld [vmem:[%s4 + $0xe0] sm:$0xff]
  %v74 = vld [vmem:[%s4 + $0xe8] sm:$0xff]
  %v75 = vld [vmem:[%s4 + $0xf0] sm:$0xff]
  %v76 = vld [vmem:[%s4 + $0xf8] sm:$0xff]
  %v77 = vld [vmem:[%s5] sm:$0x3]
  %v79 = vlaneseq
  %v80 = vshrl.u32 %v79, 7
  %v81 = vsub.s32 0, %v80
  %v82 = vrot.slane %v77, %v81
  %v83 = vlaneseq
  %v84 = vshrl.u32 %v83, 7
  %v85 = vsub.s32 1, %v84
  %v86 = vrot.slane %v77, %v85
  %v89 = vld [vmem:[%s0] sm:$0xff]
  %v90 = vld [vmem:[%s0 + $0x8] sm:$0xff]
  %v91 = vld [vmem:[%s0 + $0x10] sm:$0xff]
  %v92 = vld [vmem:[%s0 + $0x18] sm:$0xff]
  %v93 = vld [vmem:[%s0 + $0x20] sm:$0xff]
  %v94 = vld [vmem:[%s0 + $0x28] sm:$0xff]
  %v95 = vld [vmem:[%s0 + $0x30] sm:$0xff]
  %v96 = vld [vmem:[%s0 + $0x38] sm:$0xff]
  %v97 = vld [vmem:[%s1] sm:$0xff]
  %v98 = vld [vmem:[%s1 + $0x8] sm:$0xff]
  %v99 = vld [vmem:[%s3] sm:$0x3]
  %v101 = vlaneseq
  %v102 = vshrl.u32 %v101, 7
  %v103 = vsub.s32 0, %v102
  %v104 = vrot.slane %v99, %v103
  %v105 = vlaneseq
  %v106 = vshrl.u32 %v105, 7
  %v107 = vsub.s32 1, %v106
  %v108 = vrot.slane %v99, %v107
  %vm111 = vcmask 64512
  %v113 = vsel %vm111, %v89, 0
  %v116 = vsel %vm111, %v90, 0
  %v119 = vsel %vm111, %v91, 0
  %v122 = vsel %vm111, %v92, 0
  %v125 = vsel %vm111, %v93, 0
  %v128 = vsel %vm111, %v94, 0
  %v131 = vsel %vm111, %v95, 0
  %v134 = vsel %vm111, %v96, 0
  %136 = vmatprep.subr.mxu0 %v98
  %137 = vmatpush1.msra.mxu0 %v97
  %138 = vmatprep.subr.mxu0 0.0
  %139 = vmatpush1.msra.mxu0 0.0
  %140 = vmatprep.subr.mxu0 0.0
  %141 = vmatpush1.msra.mxu0 0.0
  %142 = vmatprep.subr.mxu0 0.0
  %143 = vmatpush1.msra.mxu0 0.0
  %144 = vmatprep.subr.mxu0 0.0
  %145 = vmatpush1.msra.mxu0 0.0
  %146 = vmatprep.subr.mxu0 0.0
  %147 = vmatpush1.msra.mxu0 0.0
  %148 = vmatprep.subr.mxu0 0.0
  %149 = vmatpush1.msra.mxu0 0.0
  %150 = vmatprep.subr.mxu0 0.0
  %151 = vmatpush1.msra.mxu0 0.0
  %152 = vmatprep.subr.mxu0 0.0
  %153 = vmatpush1.msra.mxu0 0.0
  %154 = vmatprep.subr.mxu0 0.0
  %155 = vmatpush1.msra.mxu0 0.0
  %156 = vmatprep.subr.mxu0 0.0
  %157 = vmatpush1.msra.mxu0 0.0
  %158 = vmatprep.subr.mxu0 0.0
  %159 = vmatpush1.msra.mxu0 0.0
  %160 = vmatprep.subr.mxu0 0.0
  %161 = vmatpush1.msra.mxu0 0.0
  %162 = vmatprep.subr.mxu0 0.0
  %163 = vmatpush1.msra.mxu0 0.0
  %164 = vmatprep.subr.mxu0 0.0
  %165 = vmatpush1.msra.mxu0 0.0
  %166 = vmatprep.subr.mxu0 0.0
  %167 = vmatpush1.msra.mxu0 0.0
  %168 = vmatprep.subr.mxu0 0.0
  %169 = vmatpush1.msra.mxu0 0.0
  %170 = vmatprep.subr.mxu0 0.0
  %171 = vmatpush1.msra.mxu0 0.0
  %172 = vmatprep.subr.mxu0 0.0
  %173 = vmatpush1.msra.mxu0 0.0
  %174 = vmatprep.subr.mxu0 0.0
  %175 = vmatpush1.msra.mxu0 0.0
  %176 = vmatprep.subr.mxu0 0.0
  %177 = vmatpush1.msra.mxu0 0.0
  %178 = vmatprep.subr.mxu0 0.0
  %179 = vmatpush1.msra.mxu0 0.0
  %180 = vmatprep.subr.mxu0 0.0
  %181 = vmatpush1.msra.mxu0 0.0
  %182 = vmatprep.subr.mxu0 0.0
  %183 = vmatpush1.msra.mxu0 0.0
  %184 = vmatprep.subr.mxu0 0.0
  %185 = vmatpush1.msra.mxu0 0.0
  %186 = vmatprep.subr.mxu0 0.0
  %187 = vmatpush1.msra.mxu0 0.0
  %188 = vmatprep.subr.mxu0 0.0
  %189 = vmatpush1.msra.mxu0 0.0
  %190 = vmatprep.subr.mxu0 0.0
  %191 = vmatpush1.msra.mxu0 0.0
  %192 = vmatprep.subr.mxu0 0.0
  %193 = vmatpush1.msra.mxu0 0.0
  %194 = vmatprep.subr.mxu0 0.0
  %195 = vmatpush1.msra.mxu0 0.0
  %196 = vmatprep.subr.mxu0 0.0
  %197 = vmatpush1.msra.mxu0 0.0
  %198 = vmatprep.subr.mxu0 0.0
  %199 = vmatpush1.msra.mxu0 0.0
  %200 = vmatprep.mubr.f32.mxu0 0.0
  %201 = vmatmul.mubr.f32.gmra.mrb[0].mxu0 %v113
  %v202 = vpop.f32.mrb[0].mxu0
  %v203 = vadd.f32 %v104, %v202
  %v204 = vpop.f32.mrb[0].mxu0
  %v205 = vadd.f32 %v108, %v204
  %206 = vmatprep.mubr.f32.mxu0 0.0
  %207 = vmatmul.mubr.f32.gmra.mrb[0].mxu0 %v116
  %v208 = vpop.f32.mrb[0].mxu0
  %v209 = vadd.f32 %v104, %v208
  %v210 = vpop.f32.mrb[0].mxu0
  %v211 = vadd.f32 %v108, %v210
  %212 = vmatprep.mubr.f32.mxu0 0.0
  %213 = vmatmul.mubr.f32.gmra.mrb[0].mxu0 %v119
  %v214 = vpop.f32.mrb[0].mxu0
  %v215 = vadd.f32 %v104, %v214
  %v216 = vpop.f32.mrb[0].mxu0
  %v217 = vadd.f32 %v108, %v216
  %218 = vmatprep.mubr.f32.mxu0 0.0
  %219 = vmatmul.mubr.f32.gmra.mrb[0].mxu0 %v122
  %v220 = vpop.f32.mrb[0].mxu0
  %v221 = vadd.f32 %v104, %v220
  %v222 = vpop.f32.mrb[0].mxu0
  %v223 = vadd.f32 %v108, %v222
  %224 = vmatprep.mubr.f32.mxu0 0.0
  %225 = vmatmul.mubr.f32.gmra.mrb[0].mxu0 %v125
  %v226 = vpop.f32.mrb[0].mxu0
  %v227 = vadd.f32 %v104, %v226
  %v228 = vpop.f32.mrb[0].mxu0
  %v229 = vadd.f32 %v108, %v228
  %230 = vmatprep.mubr.f32.mxu0 0.0
  %231 = vmatmul.mubr.f32.gmra.mrb[0].mxu0 %v128
  %v232 = vpop.f32.mrb[0].mxu0
  %v233 = vadd.f32 %v104, %v232
  %v234 = vpop.f32.mrb[0].mxu0
  %v235 = vadd.f32 %v108, %v234
  %236 = vmatprep.mubr.f32.mxu0 0.0
  %237 = vmatmul.mubr.f32.gmra.mrb[0].mxu0 %v131
  %v238 = vpop.f32.mrb[0].mxu0
  %v239 = vadd.f32 %v104, %v238
  %v240 = vpop.f32.mrb[0].mxu0
  %v241 = vadd.f32 %v108, %v240
  %242 = vmatprep.mubr.f32.mxu0 0.0
  %243 = vmatmul.mubr.f32.gmra.mrb[0].mxu0 %v134
  %v244 = vpop.f32.mrb[0].mxu0
  %v245 = vadd.f32 %v104, %v244
  %v246 = vpop.f32.mrb[0].mxu0
  %v247 = vadd.f32 %v108, %v246
  %248 = vdwg.mxu0
  %249 = vst [vmem:[#allocation2] sm:$0xff] %v203
  %250 = vst [vmem:[#allocation2 + $0x8] sm:$0xff] %v205
  %251 = vst [vmem:[#allocation2 + $0x10] sm:$0xff] %v209
  %252 = vst [vmem:[#allocation2 + $0x18] sm:$0xff] %v211
  %253 = vst [vmem:[#allocation2 + $0x20] sm:$0xff] %v215
  %254 = vst [vmem:[#allocation2 + $0x28] sm:$0xff] %v217
  %255 = vst [vmem:[#allocation2 + $0x30] sm:$0xff] %v221
  %256 = vst [vmem:[#allocation2 + $0x38] sm:$0xff] %v223
  %257 = vst [vmem:[#allocation2 + $0x40] sm:$0xff] %v227
  %258 = vst [vmem:[#allocation2 + $0x48] sm:$0xff] %v229
  %259 = vst [vmem:[#allocation2 + $0x50] sm:$0xff] %v233
  %260 = vst [vmem:[#allocation2 + $0x58] sm:$0xff] %v235
  %261 = vst [vmem:[#allocation2 + $0x60] sm:$0xff] %v239
  %262 = vst [vmem:[#allocation2 + $0x68] sm:$0xff] %v241
  %263 = vst [vmem:[#allocation2 + $0x70] sm:$0xff] %v245
  %264 = vst [vmem:[#allocation2 + $0x78] sm:$0xff] %v247
  %v265 = vlaneseq
  %v266 = vand.u32 %v265, 127
  %v267 = vadd.s32 %v266, 128
  %vm268 = vcmp.ge.s32.totalorder %v266, 128
  %vm269 = vcmp.ge.s32.totalorder %v267, 128
  %vm270 = vcmp.lt.s32.totalorder %v266, 192
  %vm271 = vcmp.lt.s32.totalorder %v267, 192
  %vm272 = vmand %vm268, %vm270
  %vm273 = vmand %vm269, %vm271
  %s274 = smul.u32 0, 2
  %s275 = smul.addr %s274, 8
  %s276 = scalar_lea.vmem [#allocation2], %s275
  %v277 = vld [vmem:[%s276] sm:$0xff]
  %v278 = vld [vmem:[%s276 + $0x8] sm:$0xff]
  %vm279 = vcmask 523264
  %v281 = vsel %vm279, 0.0, 0
  %283 = vmatprep.subr.mxu0 %v30
  %284 = vmatpush1.msra.mxu0 %v29
  %285 = vmatprep.subr.mxu0 %v32
  %286 = vmatpush1.msra.mxu0 %v31
  %287 = vmatprep.subr.mxu0 %v34
  %288 = vmatpush1.msra.mxu0 %v33
  %289 = vmatprep.subr.mxu0 %v36
  %290 = vmatpush1.msra.mxu0 %v35
  %291 = vmatprep.subr.mxu0 %v38
  %292 = vmatpush1.msra.mxu0 %v37
  %293 = vmatprep.subr.mxu0 %v40
  %294 = vmatpush1.msra.mxu0 %v39
  %295 = vmatprep.subr.mxu0 %v42
  %296 = vmatpush1.msra.mxu0 %v41
  %297 = vmatprep.subr.mxu0 %v44
  %298 = vmatpush1.msra.mxu0 %v43
  %299 = vmatprep.subr.mxu0 0.0
  %300 = vmatpush1.msra.mxu0 0.0
  %301 = vmatprep.subr.mxu0 0.0
  %302 = vmatpush1.msra.mxu0 0.0
  %303 = vmatprep.subr.mxu0 0.0
  %304 = vmatpush1.msra.mxu0 0.0
  %305 = vmatprep.subr.mxu0 0.0
  %306 = vmatpush1.msra.mxu0 0.0
  %307 = vmatprep.subr.mxu0 0.0
  %308 = vmatpush1.msra.mxu0 0.0
  %309 = vmatprep.subr.mxu0 0.0
  %310 = vmatpush1.msra.mxu0 0.0
  %311 = vmatprep.subr.mxu0 0.0
  %312 = vmatpush1.msra.mxu0 0.0
  %313 = vmatprep.subr.mxu0 0.0
  %314 = vmatpush1.msra.mxu0 0.0
  %315 = vmatprep.subr.mxu0 0.0
  %316 = vmatpush1.msra.mxu0 0.0
  %317 = vmatprep.subr.mxu0 0.0
  %318 = vmatpush1.msra.mxu0 0.0
  %319 = vmatprep.subr.mxu0 0.0
  %320 = vmatpush1.msra.mxu0 0.0
  %321 = vmatprep.subr.mxu0 0.0
  %322 = vmatpush1.msra.mxu0 0.0
  %323 = vmatprep.subr.mxu0 0.0
  %324 = vmatpush1.msra.mxu0 0.0
  %325 = vmatprep.subr.mxu0 0.0
  %326 = vmatpush1.msra.mxu0 0.0
  %327 = vmatprep.subr.mxu0 0.0
  %328 = vmatpush1.msra.mxu0 0.0
  %329 = vmatprep.subr.mxu0 0.0
  %330 = vmatpush1.msra.mxu0 0.0
  %331 = vmatprep.subr.mxu0 0.0
  %332 = vmatpush1.msra.mxu0 0.0
  %333 = vmatprep.subr.mxu0 0.0
  %334 = vmatpush1.msra.mxu0 0.0
  %335 = vmatprep.subr.mxu0 0.0
  %336 = vmatpush1.msra.mxu0 0.0
  %337 = vmatprep.subr.mxu0 0.0
  %338 = vmatpush1.msra.mxu0 0.0
  %339 = vmatprep.subr.mxu0 0.0
  %340 = vmatpush1.msra.mxu0 0.0
  %341 = vmatprep.subr.mxu0 0.0
  %342 = vmatpush1.msra.mxu0 0.0
  %343 = vmatprep.subr.mxu0 0.0
  %344 = vmatpush1.msra.mxu0 0.0
  %345 = vmatprep.subr.mxu0 0.0
  %346 = vmatpush1.msra.mxu0 0.0
  %347 = vmatprep.mubr.f32.mxu0 0.0
  %348 = vmatmul.mubr.f32.gmra.mrb[0].mxu0 %v281
  %v349 = vpop.f32.mrb[0].mxu0
  %v350 = vadd.f32 0.0, %v349
  %v351 = vpop.f32.mrb[0].mxu0
  %v352 = vadd.f32 0.0, %v351
  %353 = vdwg.mxu0
  %v354 = vadd.f32 %v277, %v350
  %v355 = vadd.f32 %v278, %v352
  %v356 = vtanh.pop %v354
  %v357 = vtanh.pop %v355
  %v358 = vxor.u32 %v354, 2147483648
  %v359 = vxor.u32 %v355, 2147483648
  %v360 = vmul.f32 %v358, 1.442695
  %v361 = vpow.pop %v360
  %v362 = vmul.f32 %v359, 1.442695
  %v363 = vpow.pop %v362
  %v364 = vadd.f32 %v361, 1.0
  %v365 = vadd.f32 %v363, 1.0
  %v366 = vrcp.pop %v364
  %v367 = vmul.f32 1.0, %v366
  %v368 = vrcp.pop %v365
  %v369 = vmul.f32 1.0, %v368
  %v370 = vsel %vm272, %v356, %v367
  %v371 = vsel %vm273, %v357, %v369
  %v372 = vmul.f32 %v370, 0.0
  %v373 = vmul.f32 %v370, %v371
  %375 = vrot.lane.b32.xlu0 %v373, 64
  %v376 = vpop.permute.xlu0 %375
  %v378 = vadd.f32 %v372, %v376
  %v379 = vtanh.pop %v378
  %v380 = vmul.f32 %v371, %v379
  %382 = vrot.lane.b32.xlu0 %v380, 64
  %v383 = vpop.permute.xlu0 %382
  %v385 = vsel %vm279, %v383, 0.0
  %386 = vmatprep.subr.mxu0 %v46
  %387 = vmatpush1.msra.mxu0 %v45
  %388 = vmatprep.subr.mxu0 %v48
  %389 = vmatpush1.msra.mxu0 %v47
  %390 = vmatprep.subr.mxu0 %v50
  %391 = vmatpush1.msra.mxu0 %v49
  %392 = vmatprep.subr.mxu0 %v52
  %393 = vmatpush1.msra.mxu0 %v51
  %394 = vmatprep.subr.mxu0 %v54
  %395 = vmatpush1.msra.mxu0 %v53
  %396 = vmatprep.subr.mxu0 %v56
  %397 = vmatpush1.msra.mxu0 %v55
  %398 = vmatprep.subr.mxu0 %v58
  %399 = vmatpush1.msra.mxu0 %v57
  %400 = vmatprep.subr.mxu0 %v60
  %401 = vmatpush1.msra.mxu0 %v59
  %402 = vmatprep.subr.mxu0 %v62
  %403 = vmatpush1.msra.mxu0 %v61
  %404 = vmatprep.subr.mxu0 %v64
  %405 = vmatpush1.msra.mxu0 %v63
  %406 = vmatprep.subr.mxu0 %v66
  %407 = vmatpush1.msra.mxu0 %v65
  %408 = vmatprep.subr.mxu0 %v68
  %409 = vmatpush1.msra.mxu0 %v67
  %410 = vmatprep.subr.mxu0 %v70
  %411 = vmatpush1.msra.mxu0 %v69
  %412 = vmatprep.subr.mxu0 %v72
  %413 = vmatpush1.msra.mxu0 %v71
  %414 = vmatprep.subr.mxu0 %v74
  %415 = vmatpush1.msra.mxu0 %v73
  %416 = vmatprep.subr.mxu0 %v76
  %417 = vmatpush1.msra.mxu0 %v75
  %418 = vmatprep.subr.mxu0 0.0
  %419 = vmatpush1.msra.mxu0 0.0
  %420 = vmatprep.subr.mxu0 0.0
  %421 = vmatpush1.msra.mxu0 0.0
  %422 = vmatprep.subr.mxu0 0.0
  %423 = vmatpush1.msra.mxu0 0.0
  %424 = vmatprep.subr.mxu0 0.0
  %425 = vmatpush1.msra.mxu0 0.0
  %426 = vmatprep.subr.mxu0 0.0
  %427 = vmatpush1.msra.mxu0 0.0
  %428 = vmatprep.subr.mxu0 0.0
  %429 = vmatpush1.msra.mxu0 0.0
  %430 = vmatprep.subr.mxu0 0.0
  %431 = vmatpush1.msra.mxu0 0.0
  %432 = vmatprep.subr.mxu0 0.0
  %433 = vmatpush1.msra.mxu0 0.0
  %434 = vmatprep.subr.mxu0 0.0
  %435 = vmatpush1.msra.mxu0 0.0
  %436 = vmatprep.subr.mxu0 0.0
  %437 = vmatpush1.msra.mxu0 0.0
  %438 = vmatprep.subr.mxu0 0.0
  %439 = vmatpush1.msra.mxu0 0.0
  %440 = vmatprep.subr.mxu0 0.0
  %441 = vmatpush1.msra.mxu0 0.0
  %442 = vmatprep.subr.mxu0 0.0
  %443 = vmatpush1.msra.mxu0 0.0
  %444 = vmatprep.subr.mxu0 0.0
  %445 = vmatpush1.msra.mxu0 0.0
  %446 = vmatprep.subr.mxu0 0.0
  %447 = vmatpush1.msra.mxu0 0.0
  %448 = vmatprep.subr.mxu0 0.0
  %449 = vmatpush1.msra.mxu0 0.0
  %450 = vmatprep.mubr.f32.mxu0 0.0
  %451 = vmatmul.mubr.f32.gmra.mrb[0].mxu0 %v385
  %v452 = vpop.f32.mrb[0].mxu0
  %v453 = vadd.f32 %v82, %v452
  %v454 = vpop.f32.mrb[0].mxu0
  %v455 = vadd.f32 %v86, %v454
  %456 = vdwg.mxu0
  %v457 = vtanh.pop %v453
  %v458 = vtanh.pop %v455
  %v459 = vxor.u32 %v453, 2147483648
  %v460 = vxor.u32 %v455, 2147483648
  %v461 = vmul.f32 %v459, 1.442695
  %v462 = vpow.pop %v461
  %v463 = vmul.f32 %v460, 1.442695
  %v464 = vpow.pop %v463
  %v465 = vadd.f32 %v462, 1.0
  %v466 = vadd.f32 %v464, 1.0
  %v467 = vrcp.pop %v465
  %v468 = vmul.f32 1.0, %v467
  %v469 = vrcp.pop %v466
  %v470 = vmul.f32 1.0, %v469
  %v471 = vsel %vm272, %v457, %v468
  %v472 = vsel %vm273, %v458, %v470
  %v473 = vmul.f32 %v471, 0.0
  %v474 = vmul.f32 %v471, %v472
  %476 = vrot.lane.b32.xlu0 %v474, 64
  %v477 = vpop.permute.xlu0 %476
  %v479 = vadd.f32 %v473, %v477
  %v480 = vtanh.pop %v479
  %v481 = vmul.f32 %v472, %v480
  %s482 = smul.u32 1, 2
  %s483 = smul.addr %s482, 8
  %s484 = scalar_lea.vmem [#allocation2], %s483
  %v485 = vld [vmem:[%s484] sm:$0xff]
  %v486 = vld [vmem:[%s484 + $0x8] sm:$0xff]
  %v487 = vsel %vm279, %v383, 0
  %489 = vmatprep.subr.mxu0 %v30
  %490 = vmatpush1.msra.mxu0 %v29
  %491 = vmatprep.subr.mxu0 %v32
  %492 = vmatpush1.msra.mxu0 %v31
  %493 = vmatprep.subr.mxu0 %v34
  %494 = vmatpush1.msra.mxu0 %v33
  %495 = vmatprep.subr.mxu0 %v36
  %496 = vmatpush1.msra.mxu0 %v35
  %497 = vmatprep.subr.mxu0 %v38
  %498 = vmatpush1.msra.mxu0 %v37
  %499 = vmatprep.subr.mxu0 %v40
  %500 = vmatpush1.msra.mxu0 %v39
  %501 = vmatprep.subr.mxu0 %v42
  %502 = vmatpush1.msra.mxu0 %v41
  %503 = vmatprep.subr.mxu0 %v44
  %504 = vmatpush1.msra.mxu0 %v43
  %505 = vmatprep.subr.mxu0 0.0
  %506 = vmatpush1.msra.mxu0 0.0
  %507 = vmatprep.subr.mxu0 0.0
  %508 = vmatpush1.msra.mxu0 0.0
  %509 = vmatprep.subr.mxu0 0.0
  %510 = vmatpush1.msra.mxu0 0.0
  %511 = vmatprep.subr.mxu0 0.0
  %512 = vmatpush1.msra.mxu0 0.0
  %513 = vmatprep.subr.mxu0 0.0
  %514 = vmatpush1.msra.mxu0 0.0
  %515 = vmatprep.subr.mxu0 0.0
  %516 = vmatpush1.msra.mxu0 0.0
  %517 = vmatprep.subr.mxu0 0.0
  %518 = vmatpush1.msra.mxu0 0.0
  %519 = vmatprep.subr.mxu0 0.0
  %520 = vmatpush1.msra.mxu0 0.0
  %521 = vmatprep.subr.mxu0 0.0
  %522 = vmatpush1.msra.mxu0 0.0
  %523 = vmatprep.subr.mxu0 0.0
  %524 = vmatpush1.msra.mxu0 0.0
  %525 = vmatprep.subr.mxu0 0.0
  %526 = vmatpush1.msra.mxu0 0.0
  %527 = vmatprep.subr.mxu0 0.0
  %528 = vmatpush1.msra.mxu0 0.0
  %529 = vmatprep.subr.mxu0 0.0
  %530 = vmatpush1.msra.mxu0 0.0
  %531 = vmatprep.subr.mxu0 0.0
  %532 = vmatpush1.msra.mxu0 0.0
  %533 = vmatprep.subr.mxu0 0.0
  %534 = vmatpush1.msra.mxu0 0.0
  %535 = vmatprep.subr.mxu0 0.0
  %536 = vmatpush1.msra.mxu0 0.0
  %537 = vmatprep.subr.mxu0 0.0
  %538 = vmatpush1.msra.mxu0 0.0
  %539 = vmatprep.subr.mxu0 0.0
  %540 = vmatpush1.msra.mxu0 0.0
  %541 = vmatprep.subr.mxu0 0.0
  %542 = vmatpush1.msra.mxu0 0.0
  %543 = vmatprep.subr.mxu0 0.0
  %544 = vmatpush1.msra.mxu0 0.0
  %545 = vmatprep.subr.mxu0 0.0
  %546 = vmatpush1.msra.mxu0 0.0
  %547 = vmatprep.subr.mxu0 0.0
  %548 = vmatpush1.msra.mxu0 0.0
  %549 = vmatprep.subr.mxu0 0.0
  %550 = vmatpush1.msra.mxu0 0.0
  %551 = vmatprep.subr.mxu0 0.0
  %552 = vmatpush1.msra.mxu0 0.0
  %553 = vmatprep.mubr.f32.mxu0 0.0
  %554 = vmatmul.mubr.f32.gmra.mrb[0].mxu0 %v487
  %v555 = vpop.f32.mrb[0].mxu0
  %v556 = vadd.f32 0.0, %v555
  %v557 = vpop.f32.mrb[0].mxu0
  %v558 = vadd.f32 0.0, %v557
  %559 = vdwg.mxu0
  %v560 = vadd.f32 %v485, %v556
  %v561 = vadd.f32 %v486, %v558
  %v562 = vtanh.pop %v560
  %v563 = vtanh.pop %v561
  %v564 = vxor.u32 %v560, 2147483648
  %v565 = vxor.u32 %v561, 2147483648
  %v566 = vmul.f32 %v564, 1.442695
  %v567 = vpow.pop %v566
  %v568 = vmul.f32 %v565, 1.442695
  %v569 = vpow.pop %v568
  %v570 = vadd.f32 %v567, 1.0
  %v571 = vadd.f32 %v569, 1.0
  %v572 = vrcp.pop %v570
  %v573 = vmul.f32 1.0, %v572
  %v574 = vrcp.pop %v571
  %v575 = vmul.f32 1.0, %v574
  %v576 = vsel %vm272, %v562, %v573
  %v577 = vsel %vm273, %v563, %v575
  %v578 = vmul.f32 %v576, %v378
  %v579 = vmul.f32 %v576, %v577
  %581 = vrot.lane.b32.xlu0 %v579, 64
  %v582 = vpop.permute.xlu0 %581
  %v584 = vadd.f32 %v578, %v582
  %v585 = vtanh.pop %v584
  %v586 = vmul.f32 %v577, %v585
  %588 = vrot.lane.b32.xlu0 %v586, 64
  %v589 = vpop.permute.xlu0 %588
  %v591 = vsel %vm279, %v589, %v481
  %592 = vmatprep.subr.mxu0 %v46
  %593 = vmatpush1.msra.mxu0 %v45
  %594 = vmatprep.subr.mxu0 %v48
  %595 = vmatpush1.msra.mxu0 %v47
  %596 = vmatprep.subr.mxu0 %v50
  %597 = vmatpush1.msra.mxu0 %v49
  %598 = vmatprep.subr.mxu0 %v52
  %599 = vmatpush1.msra.mxu0 %v51
  %600 = vmatprep.subr.mxu0 %v54
  %601 = vmatpush1.msra.mxu0 %v53
  %602 = vmatprep.subr.mxu0 %v56
  %603 = vmatpush1.msra.mxu0 %v55
  %604 = vmatprep.subr.mxu0 %v58
  %605 = vmatpush1.msra.mxu0 %v57
  %606 = vmatprep.subr.mxu0 %v60
  %607 = vmatpush1.msra.mxu0 %v59
  %608 = vmatprep.subr.mxu0 %v62
  %609 = vmatpush1.msra.mxu0 %v61
  %610 = vmatprep.subr.mxu0 %v64
  %611 = vmatpush1.msra.mxu0 %v63
  %612 = vmatprep.subr.mxu0 %v66
  %613 = vmatpush1.msra.mxu0 %v65
  %614 = vmatprep.subr.mxu0 %v68
  %615 = vmatpush1.msra.mxu0 %v67
  %616 = vmatprep.subr.mxu0 %v70
  %617 = vmatpush1.msra.mxu0 %v69
  %618 = vmatprep.subr.mxu0 %v72
  %619 = vmatpush1.msra.mxu0 %v71
  %620 = vmatprep.subr.mxu0 %v74
  %621 = vmatpush1.msra.mxu0 %v73
  %622 = vmatprep.subr.mxu0 %v76
  %623 = vmatpush1.msra.mxu0 %v75
  %624 = vmatprep.subr.mxu0 0.0
  %625 = vmatpush1.msra.mxu0 0.0
  %626 = vmatprep.subr.mxu0 0.0
  %627 = vmatpush1.msra.mxu0 0.0
  %628 = vmatprep.subr.mxu0 0.0
  %629 = vmatpush1.msra.mxu0 0.0
  %630 = vmatprep.subr.mxu0 0.0
  %631 = vmatpush1.msra.mxu0 0.0
  %632 = vmatprep.subr.mxu0 0.0
  %633 = vmatpush1.msra.mxu0 0.0
  %634 = vmatprep.subr.mxu0 0.0
  %635 = vmatpush1.msra.mxu0 0.0
  %636 = vmatprep.subr.mxu0 0.0
  %637 = vmatpush1.msra.mxu0 0.0
  %638 = vmatprep.subr.mxu0 0.0
  %639 = vmatpush1.msra.mxu0 0.0
  %640 = vmatprep.subr.mxu0 0.0
  %641 = vmatpush1.msra.mxu0 0.0
  %642 = vmatprep.subr.mxu0 0.0
  %643 = vmatpush1.msra.mxu0 0.0
  %644 = vmatprep.subr.mxu0 0.0
  %645 = vmatpush1.msra.mxu0 0.0
  %646 = vmatprep.subr.mxu0 0.0
  %647 = vmatpush1.msra.mxu0 0.0
  %648 = vmatprep.subr.mxu0 0.0
  %649 = vmatpush1.msra.mxu0 0.0
  %650 = vmatprep.subr.mxu0 0.0
  %651 = vmatpush1.msra.mxu0 0.0
  %652 = vmatprep.subr.mxu0 0.0
  %653 = vmatpush1.msra.mxu0 0.0
  %654 = vmatprep.subr.mxu0 0.0
  %655 = vmatpush1.msra.mxu0 0.0
  %656 = vmatprep.mubr.f32.mxu0 0.0
  %657 = vmatmul.mubr.f32.gmra.mrb[0].mxu0 %v591
  %v658 = vpop.f32.mrb[0].mxu0
  %v659 = vadd.f32 %v82, %v658
  %v660 = vpop.f32.mrb[0].mxu0
  %v661 = vadd.f32 %v86, %v660
  %662 = vdwg.mxu0
  %v663 = vtanh.pop %v659
  %v664 = vtanh.pop %v661
  %v665 = vxor.u32 %v659, 2147483648
  %v666 = vxor.u32 %v661, 2147483648
  %v667 = vmul.f32 %v665, 1.442695
  %v668 = vpow.pop %v667
  %v669 = vmul.f32 %v666, 1.442695
  %v670 = vpow.pop %v669
  %v671 = vadd.f32 %v668, 1.0
  %v672 = vadd.f32 %v670, 1.0
  %v673 = vrcp.pop %v671
  %v674 = vmul.f32 1.0, %v673
  %v675 = vrcp.pop %v672
  %v676 = vmul.f32 1.0, %v675
  %v677 = vsel %vm272, %v663, %v674
  %v678 = vsel %vm273, %v664, %v676
  %v679 = vmul.f32 %v677, %v479
  %v680 = vmul.f32 %v677, %v678
  %682 = vrot.lane.b32.xlu0 %v680, 64
  %v683 = vpop.permute.xlu0 %682
  %v685 = vadd.f32 %v679, %v683
  %v686 = vtanh.pop %v685
  %v687 = vmul.f32 %v678, %v686
  %s688 = smul.u32 2, 2
  %s689 = smul.addr %s688, 8
  %s690 = scalar_lea.vmem [#allocation2], %s689
  %v691 = vld [vmem:[%s690] sm:$0xff]
  %v692 = vld [vmem:[%s690 + $0x8] sm:$0xff]
  %v693 = vsel %vm279, %v589, 0
  %695 = vmatprep.subr.mxu0 %v30
  %696 = vmatpush1.msra.mxu0 %v29
  %697 = vmatprep.subr.mxu0 %v32
  %698 = vmatpush1.msra.mxu0 %v31
  %699 = vmatprep.subr.mxu0 %v34
  %700 = vmatpush1.msra.mxu0 %v33
  %701 = vmatprep.subr.mxu0 %v36
  %702 = vmatpush1.msra.mxu0 %v35
  %703 = vmatprep.subr.mxu0 %v38
  %704 = vmatpush1.msra.mxu0 %v37
  %705 = vmatprep.subr.mxu0 %v40
  %706 = vmatpush1.msra.mxu0 %v39
  %707 = vmatprep.subr.mxu0 %v42
  %708 = vmatpush1.msra.mxu0 %v41
  %709 = vmatprep.subr.mxu0 %v44
  %710 = vmatpush1.msra.mxu0 %v43
  %711 = vmatprep.subr.mxu0 0.0
  %712 = vmatpush1.msra.mxu0 0.0
  %713 = vmatprep.subr.mxu0 0.0
  %714 = vmatpush1.msra.mxu0 0.0
  %715 = vmatprep.subr.mxu0 0.0
  %716 = vmatpush1.msra.mxu0 0.0
  %717 = vmatprep.subr.mxu0 0.0
  %718 = vmatpush1.msra.mxu0 0.0
  %719 = vmatprep.subr.mxu0 0.0
  %720 = vmatpush1.msra.mxu0 0.0
  %721 = vmatprep.subr.mxu0 0.0
  %722 = vmatpush1.msra.mxu0 0.0
  %723 = vmatprep.subr.mxu0 0.0
  %724 = vmatpush1.msra.mxu0 0.0
  %725 = vmatprep.subr.mxu0 0.0
  %726 = vmatpush1.msra.mxu0 0.0
  %727 = vmatprep.subr.mxu0 0.0
  %728 = vmatpush1.msra.mxu0 0.0
  %729 = vmatprep.subr.mxu0 0.0
  %730 = vmatpush1.msra.mxu0 0.0
  %731 = vmatprep.subr.mxu0 0.0
  %732 = vmatpush1.msra.mxu0 0.0
  %733 = vmatprep.subr.mxu0 0.0
  %734 = vmatpush1.msra.mxu0 0.0
  %735 = vmatprep.subr.mxu0 0.0
  %736 = vmatpush1.msra.mxu0 0.0
  %737 = vmatprep.subr.mxu0 0.0
  %738 = vmatpush1.msra.mxu0 0.0
  %739 = vmatprep.subr.mxu0 0.0
  %740 = vmatpush1.msra.mxu0 0.0
  %741 = vmatprep.subr.mxu0 0.0
  %742 = vmatpush1.msra.mxu0 0.0
  %743 = vmatprep.subr.mxu0 0.0
  %744 = vmatpush1.msra.mxu0 0.0
  %745 = vmatprep.subr.mxu0 0.0
  %746 = vmatpush1.msra.mxu0 0.0
  %747 = vmatprep.subr.mxu0 0.0
  %748 = vmatpush1.msra.mxu0 0.0
  %749 = vmatprep.subr.mxu0 0.0
  %750 = vmatpush1.msra.mxu0 0.0
  %751 = vmatprep.subr.mxu0 0.0
  %752 = vmatpush1.msra.mxu0 0.0
  %753 = vmatprep.subr.mxu0 0.0
  %754 = vmatpush1.msra.mxu0 0.0
  %755 = vmatprep.subr.mxu0 0.0
  %756 = vmatpush1.msra.mxu0 0.0
  %757 = vmatprep.subr.mxu0 0.0
  %758 = vmatpush1.msra.mxu0 0.0
  %759 = vmatprep.mubr.f32.mxu0 0.0
  %760 = vmatmul.mubr.f32.gmra.mrb[0].mxu0 %v693
  %v761 = vpop.f32.mrb[0].mxu0
  %v762 = vadd.f32 0.0, %v761
  %v763 = vpop.f32.mrb[0].mxu0
  %v764 = vadd.f32 0.0, %v763
  %765 = vdwg.mxu0
  %v766 = vadd.f32 %v691, %v762
  %v767 = vadd.f32 %v692, %v764
  %v768 = vtanh.pop %v766
  %v769 = vtanh.pop %v767
  %v770 = vxor.u32 %v766, 2147483648
  %v771 = vxor.u32 %v767, 2147483648
  %v772 = vmul.f32 %v770, 1.442695
  %v773 = vpow.pop %v772
  %v774 = vmul.f32 %v771, 1.442695
  %v775 = vpow.pop %v774
  %v776 = vadd.f32 %v773, 1.0
  %v777 = vadd.f32 %v775, 1.0
  %v778 = vrcp.pop %v776
  %v779 = vmul.f32 1.0, %v778
  %v780 = vrcp.pop %v777
  %v781 = vmul.f32 1.0, %v780
  %v782 = vsel %vm272, %v768, %v779
  %v783 = vsel %vm273, %v769, %v781
  %v784 = vmul.f32 %v782, %v584
  %v785 = vmul.f32 %v782, %v783
  %787 = vrot.lane.b32.xlu0 %v785, 64
  %v788 = vpop.permute.xlu0 %787
  %v790 = vadd.f32 %v784, %v788
  %v791 = vtanh.pop %v790
  %v792 = vmul.f32 %v783, %v791
  %794 = vrot.lane.b32.xlu0 %v792, 64
  %v795 = vpop.permute.xlu0 %794
  %v797 = vsel %vm279, %v795, %v687
  %798 = vmatprep.subr.mxu0 %v46
  %799 = vmatpush1.msra.mxu0 %v45
  %800 = vmatprep.subr.mxu0 %v48
  %801 = vmatpush1.msra.mxu0 %v47
  %802 = vmatprep.subr.mxu0 %v50
  %803 = vmatpush1.msra.mxu0 %v49
  %804 = vmatprep.subr.mxu0 %v52
  %805 = vmatpush1.msra.mxu0 %v51
  %806 = vmatprep.subr.mxu0 %v54
  %807 = vmatpush1.msra.mxu0 %v53
  %808 = vmatprep.subr.mxu0 %v56
  %809 = vmatpush1.msra.mxu0 %v55
  %810 = vmatprep.subr.mxu0 %v58
  %811 = vmatpush1.msra.mxu0 %v57
  %812 = vmatprep.subr.mxu0 %v60
  %813 = vmatpush1.msra.mxu0 %v59
  %814 = vmatprep.subr.mxu0 %v62
  %815 = vmatpush1.msra.mxu0 %v61
  %816 = vmatprep.subr.mxu0 %v64
  %817 = vmatpush1.msra.mxu0 %v63
  %818 = vmatprep.subr.mxu0 %v66
  %819 = vmatpush1.msra.mxu0 %v65
  %820 = vmatprep.subr.mxu0 %v68
  %821 = vmatpush1.msra.mxu0 %v67
  %822 = vmatprep.subr.mxu0 %v70
  %823 = vmatpush1.msra.mxu0 %v69
  %824 = vmatprep.subr.mxu0 %v72
  %825 = vmatpush1.msra.mxu0 %v71
  %826 = vmatprep.subr.mxu0 %v74
  %827 = vmatpush1.msra.mxu0 %v73
  %828 = vmatprep.subr.mxu0 %v76
  %829 = vmatpush1.msra.mxu0 %v75
  %830 = vmatprep.subr.mxu0 0.0
  %831 = vmatpush1.msra.mxu0 0.0
  %832 = vmatprep.subr.mxu0 0.0
  %833 = vmatpush1.msra.mxu0 0.0
  %834 = vmatprep.subr.mxu0 0.0
  %835 = vmatpush1.msra.mxu0 0.0
  %836 = vmatprep.subr.mxu0 0.0
  %837 = vmatpush1.msra.mxu0 0.0
  %838 = vmatprep.subr.mxu0 0.0
  %839 = vmatpush1.msra.mxu0 0.0
  %840 = vmatprep.subr.mxu0 0.0
  %841 = vmatpush1.msra.mxu0 0.0
  %842 = vmatprep.subr.mxu0 0.0
  %843 = vmatpush1.msra.mxu0 0.0
  %844 = vmatprep.subr.mxu0 0.0
  %845 = vmatpush1.msra.mxu0 0.0
  %846 = vmatprep.subr.mxu0 0.0
  %847 = vmatpush1.msra.mxu0 0.0
  %848 = vmatprep.subr.mxu0 0.0
  %849 = vmatpush1.msra.mxu0 0.0
  %850 = vmatprep.subr.mxu0 0.0
  %851 = vmatpush1.msra.mxu0 0.0
  %852 = vmatprep.subr.mxu0 0.0
  %853 = vmatpush1.msra.mxu0 0.0
  %854 = vmatprep.subr.mxu0 0.0
  %855 = vmatpush1.msra.mxu0 0.0
  %856 = vmatprep.subr.mxu0 0.0
  %857 = vmatpush1.msra.mxu0 0.0
  %858 = vmatprep.subr.mxu0 0.0
  %859 = vmatpush1.msra.mxu0 0.0
  %860 = vmatprep.subr.mxu0 0.0
  %861 = vmatpush1.msra.mxu0 0.0
  %862 = vmatprep.mubr.f32.mxu0 0.0
  %863 = vmatmul.mubr.f32.gmra.mrb[0].mxu0 %v797
  %v864 = vpop.f32.mrb[0].mxu0
  %v865 = vadd.f32 %v82, %v864
  %v866 = vpop.f32.mrb[0].mxu0
  %v867 = vadd.f32 %v86, %v866
  %868 = vdwg.mxu0
  %v869 = vtanh.pop %v865
  %v870 = vtanh.pop %v867
  %v871 = vxor.u32 %v865, 2147483648
  %v872 = vxor.u32 %v867, 2147483648
  %v873 = vmul.f32 %v871, 1.442695
  %v874 = vpow.pop %v873
  %v875 = vmul.f32 %v872, 1.442695
  %v876 = vpow.pop %v875
  %v877 = vadd.f32 %v874, 1.0
  %v878 = vadd.f32 %v876, 1.0
  %v879 = vrcp.pop %v877
  %v880 = vmul.f32 1.0, %v879
  %v881 = vrcp.pop %v878
  %v882 = vmul.f32 1.0, %v881
  %v883 = vsel %vm272, %v869, %v880
  %v884 = vsel %vm273, %v870, %v882
  %v885 = vmul.f32 %v883, %v685
  %v886 = vmul.f32 %v883, %v884
  %888 = vrot.lane.b32.xlu0 %v886, 64
  %v889 = vpop.permute.xlu0 %888
  %v891 = vadd.f32 %v885, %v889
  %v892 = vtanh.pop %v891
  %v893 = vmul.f32 %v884, %v892
  %s894 = smul.u32 3, 2
  %s895 = smul.addr %s894, 8
  %s896 = scalar_lea.vmem [#allocation2], %s895
  %v897 = vld [vmem:[%s896] sm:$0xff]
  %v898 = vld [vmem:[%s896 + $0x8] sm:$0xff]
  %v899 = vsel %vm279, %v795, 0
  %901 = vmatprep.subr.mxu0 %v30
  %902 = vmatpush1.msra.mxu0 %v29
  %903 = vmatprep.subr.mxu0 %v32
  %904 = vmatpush1.msra.mxu0 %v31
  %905 = vmatprep.subr.mxu0 %v34
  %906 = vmatpush1.msra.mxu0 %v33
  %907 = vmatprep.subr.mxu0 %v36
  %908 = vmatpush1.msra.mxu0 %v35
  %909 = vmatprep.subr.mxu0 %v38
  %910 = vmatpush1.msra.mxu0 %v37
  %911 = vmatprep.subr.mxu0 %v40
  %912 = vmatpush1.msra.mxu0 %v39
  %913 = vmatprep.subr.mxu0 %v42
  %914 = vmatpush1.msra.mxu0 %v41
  %915 = vmatprep.subr.mxu0 %v44
  %916 = vmatpush1.msra.mxu0 %v43
  %917 = vmatprep.subr.mxu0 0.0
  %918 = vmatpush1.msra.mxu0 0.0
  %919 = vmatprep.subr.mxu0 0.0
  %920 = vmatpush1.msra.mxu0 0.0
  %921 = vmatprep.subr.mxu0 0.0
  %922 = vmatpush1.msra.mxu0 0.0
  %923 = vmatprep.subr.mxu0 0.0
  %924 = vmatpush1.msra.mxu0 0.0
  %925 = vmatprep.subr.mxu0 0.0
  %926 = vmatpush1.msra.mxu0 0.0
  %927 = vmatprep.subr.mxu0 0.0
  %928 = vmatpush1.msra.mxu0 0.0
  %929 = vmatprep.subr.mxu0 0.0
  %930 = vmatpush1.msra.mxu0 0.0
  %931 = vmatprep.subr.mxu0 0.0
  %932 = vmatpush1.msra.mxu0 0.0
  %933 = vmatprep.subr.mxu0 0.0
  %934 = vmatpush1.msra.mxu0 0.0
  %935 = vmatprep.subr.mxu0 0.0
  %936 = vmatpush1.msra.mxu0 0.0
  %937 = vmatprep.subr.mxu0 0.0
  %938 = vmatpush1.msra.mxu0 0.0
  %939 = vmatprep.subr.mxu0 0.0
  %940 = vmatpush1.msra.mxu0 0.0
  %941 = vmatprep.subr.mxu0 0.0
  %942 = vmatpush1.msra.mxu0 0.0
  %943 = vmatprep.subr.mxu0 0.0
  %944 = vmatpush1.msra.mxu0 0.0
  %945 = vmatprep.subr.mxu0 0.0
  %946 = vmatpush1.msra.mxu0 0.0
  %947 = vmatprep.subr.mxu0 0.0
  %948 = vmatpush1.msra.mxu0 0.0
  %949 = vmatprep.subr.mxu0 0.0
  %950 = vmatpush1.msra.mxu0 0.0
  %951 = vmatprep.subr.mxu0 0.0
  %952 = vmatpush1.msra.mxu0 0.0
  %953 = vmatprep.subr.mxu0 0.0
  %954 = vmatpush1.msra.mxu0 0.0
  %955 = vmatprep.subr.mxu0 0.0
  %956 = vmatpush1.msra.mxu0 0.0
  %957 = vmatprep.subr.mxu0 0.0
  %958 = vmatpush1.msra.mxu0 0.0
  %959 = vmatprep.subr.mxu0 0.0
  %960 = vmatpush1.msra.mxu0 0.0
  %961 = vmatprep.subr.mxu0 0.0
  %962 = vmatpush1.msra.mxu0 0.0
  %963 = vmatprep.subr.mxu0 0.0
  %964 = vmatpush1.msra.mxu0 0.0
  %965 = vmatprep.mubr.f32.mxu0 0.0
  %966 = vmatmul.mubr.f32.gmra.mrb[0].mxu0 %v899
  %v967 = vpop.f32.mrb[0].mxu0
  %v968 = vadd.f32 0.0, %v967
  %v969 = vpop.f32.mrb[0].mxu0
  %v970 = vadd.f32 0.0, %v969
  %971 = vdwg.mxu0
  %v972 = vadd.f32 %v897, %v968
  %v973 = vadd.f32 %v898, %v970
  %v974 = vtanh.pop %v972
  %v975 = vtanh.pop %v973
  %v976 = vxor.u32 %v972, 2147483648
  %v977 = vxor.u32 %v973, 2147483648
  %v978 = vmul.f32 %v976, 1.442695
  %v979 = vpow.pop %v978
  %v980 = vmul.f32 %v977, 1.442695
  %v981 = vpow.pop %v980
  %v982 = vadd.f32 %v979, 1.0
  %v983 = vadd.f32 %v981, 1.0
  %v984 = vrcp.pop %v982
  %v985 = vmul.f32 1.0, %v984
  %v986 = vrcp.pop %v983
  %v987 = vmul.f32 1.0, %v986
  %v988 = vsel %vm272, %v974, %v985
  %v989 = vsel %vm273, %v975, %v987
  %v990 = vmul.f32 %v988, %v790
  %v991 = vmul.f32 %v988, %v989
  %993 = vrot.lane.b32.xlu0 %v991, 64
  %v994 = vpop.permute.xlu0 %993
  %v996 = vadd.f32 %v990, %v994
  %v997 = vtanh.pop %v996
  %v998 = vmul.f32 %v989, %v997
  %1000 = vrot.lane.b32.xlu0 %v998, 64
  %v1001 = vpop.permute.xlu0 %1000
  %v1003 = vsel %vm279, %v1001, %v893
  %1004 = vmatprep.subr.mxu0 %v46
  %1005 = vmatpush1.msra.mxu0 %v45
  %1006 = vmatprep.subr.mxu0 %v48
  %1007 = vmatpush1.msra.mxu0 %v47
  %1008 = vmatprep.subr.mxu0 %v50
  %1009 = vmatpush1.msra.mxu0 %v49
  %1010 = vmatprep.subr.mxu0 %v52
  %1011 = vmatpush1.msra.mxu0 %v51
  %1012 = vmatprep.subr.mxu0 %v54
  %1013 = vmatpush1.msra.mxu0 %v53
  %1014 = vmatprep.subr.mxu0 %v56
  %1015 = vmatpush1.msra.mxu0 %v55
  %1016 = vmatprep.subr.mxu0 %v58
  %1017 = vmatpush1.msra.mxu0 %v57
  %1018 = vmatprep.subr.mxu0 %v60
  %1019 = vmatpush1.msra.mxu0 %v59
  %1020 = vmatprep.subr.mxu0 %v62
  %1021 = vmatpush1.msra.mxu0 %v61
  %1022 = vmatprep.subr.mxu0 %v64
  %1023 = vmatpush1.msra.mxu0 %v63
  %1024 = vmatprep.subr.mxu0 %v66
  %1025 = vmatpush1.msra.mxu0 %v65
  %1026 = vmatprep.subr.mxu0 %v68
  %1027 = vmatpush1.msra.mxu0 %v67
  %1028 = vmatprep.subr.mxu0 %v70
  %1029 = vmatpush1.msra.mxu0 %v69
  %1030 = vmatprep.subr.mxu0 %v72
  %1031 = vmatpush1.msra.mxu0 %v71
  %1032 = vmatprep.subr.mxu0 %v74
  %1033 = vmatpush1.msra.mxu0 %v73
  %1034 = vmatprep.subr.mxu0 %v76
  %1035 = vmatpush1.msra.mxu0 %v75
  %1036 = vmatprep.subr.mxu0 0.0
  %1037 = vmatpush1.msra.mxu0 0.0
  %1038 = vmatprep.subr.mxu0 0.0
  %1039 = vmatpush1.msra.mxu0 0.0
  %1040 = vmatprep.subr.mxu0 0.0
  %1041 = vmatpush1.msra.mxu0 0.0
  %1042 = vmatprep.subr.mxu0 0.0
  %1043 = vmatpush1.msra.mxu0 0.0
  %1044 = vmatprep.subr.mxu0 0.0
  %1045 = vmatpush1.msra.mxu0 0.0
  %1046 = vmatprep.subr.mxu0 0.0
  %1047 = vmatpush1.msra.mxu0 0.0
  %1048 = vmatprep.subr.mxu0 0.0
  %1049 = vmatpush1.msra.mxu0 0.0
  %1050 = vmatprep.subr.mxu0 0.0
  %1051 = vmatpush1.msra.mxu0 0.0
  %1052 = vmatprep.subr.mxu0 0.0
  %1053 = vmatpush1.msra.mxu0 0.0
  %1054 = vmatprep.subr.mxu0 0.0
  %1055 = vmatpush1.msra.mxu0 0.0
  %1056 = vmatprep.subr.mxu0 0.0
  %1057 = vmatpush1.msra.mxu0 0.0
  %1058 = vmatprep.subr.mxu0 0.0
  %1059 = vmatpush1.msra.mxu0 0.0
  %1060 = vmatprep.subr.mxu0 0.0
  %1061 = vmatpush1.msra.mxu0 0.0
  %1062 = vmatprep.subr.mxu0 0.0
  %1063 = vmatpush1.msra.mxu0 0.0
  %1064 = vmatprep.subr.mxu0 0.0
  %1065 = vmatpush1.msra.mxu0 0.0
  %1066 = vmatprep.subr.mxu0 0.0
  %1067 = vmatpush1.msra.mxu0 0.0
  %1068 = vmatprep.mubr.f32.mxu0 0.0
  %1069 = vmatmul.mubr.f32.gmra.mrb[0].mxu0 %v1003
  %v1070 = vpop.f32.mrb[0].mxu0
  %v1071 = vadd.f32 %v82, %v1070
  %v1072 = vpop.f32.mrb[0].mxu0
  %v1073 = vadd.f32 %v86, %v1072
  %1074 = vdwg.mxu0
  %v1075 = vtanh.pop %v1071
  %v1076 = vtanh.pop %v1073
  %v1077 = vxor.u32 %v1071, 2147483648
  %v1078 = vxor.u32 %v1073, 2147483648
  %v1079 = vmul.f32 %v1077, 1.442695
  %v1080 = vpow.pop %v1079
  %v1081 = vmul.f32 %v1078, 1.442695
  %v1082 = vpow.pop %v1081
  %v1083 = vadd.f32 %v1080, 1.0
  %v1084 = vadd.f32 %v1082, 1.0
  %v1085 = vrcp.pop %v1083
  %v1086 = vmul.f32 1.0, %v1085
  %v1087 = vrcp.pop %v1084
  %v1088 = vmul.f32 1.0, %v1087
  %v1089 = vsel %vm272, %v1075, %v1086
  %v1090 = vsel %vm273, %v1076, %v1088
  %v1091 = vmul.f32 %v1089, %v891
  %v1092 = vmul.f32 %v1089, %v1090
  %1094 = vrot.lane.b32.xlu0 %v1092, 64
  %v1095 = vpop.permute.xlu0 %1094
  %v1097 = vadd.f32 %v1091, %v1095
  %v1098 = vtanh.pop %v1097
  %v1099 = vmul.f32 %v1090, %v1098
  %s1100 = smul.u32 4, 2
  %s1101 = smul.addr %s1100, 8
  %s1102 = scalar_lea.vmem [#allocation2], %s1101
  %v1103 = vld [vmem:[%s1102] sm:$0xff]
  %v1104 = vld [vmem:[%s1102 + $0x8] sm:$0xff]
  %v1105 = vsel %vm279, %v1001, 0
  %1107 = vmatprep.subr.mxu0 %v30
  %1108 = vmatpush1.msra.mxu0 %v29
  %1109 = vmatprep.subr.mxu0 %v32
  %1110 = vmatpush1.msra.mxu0 %v31
  %1111 = vmatprep.subr.mxu0 %v34
  %1112 = vmatpush1.msra.mxu0 %v33
  %1113 = vmatprep.subr.mxu0 %v36
  %1114 = vmatpush1.msra.mxu0 %v35
  %1115 = vmatprep.subr.mxu0 %v38
  %1116 = vmatpush1.msra.mxu0 %v37
  %1117 = vmatprep.subr.mxu0 %v40
  %1118 = vmatpush1.msra.mxu0 %v39
  %1119 = vmatprep.subr.mxu0 %v42
  %1120 = vmatpush1.msra.mxu0 %v41
  %1121 = vmatprep.subr.mxu0 %v44
  %1122 = vmatpush1.msra.mxu0 %v43
  %1123 = vmatprep.subr.mxu0 0.0
  %1124 = vmatpush1.msra.mxu0 0.0
  %1125 = vmatprep.subr.mxu0 0.0
  %1126 = vmatpush1.msra.mxu0 0.0
  %1127 = vmatprep.subr.mxu0 0.0
  %1128 = vmatpush1.msra.mxu0 0.0
  %1129 = vmatprep.subr.mxu0 0.0
  %1130 = vmatpush1.msra.mxu0 0.0
  %1131 = vmatprep.subr.mxu0 0.0
  %1132 = vmatpush1.msra.mxu0 0.0
  %1133 = vmatprep.subr.mxu0 0.0
  %1134 = vmatpush1.msra.mxu0 0.0
  %1135 = vmatprep.subr.mxu0 0.0
  %1136 = vmatpush1.msra.mxu0 0.0
  %1137 = vmatprep.subr.mxu0 0.0
  %1138 = vmatpush1.msra.mxu0 0.0
  %1139 = vmatprep.subr.mxu0 0.0
  %1140 = vmatpush1.msra.mxu0 0.0
  %1141 = vmatprep.subr.mxu0 0.0
  %1142 = vmatpush1.msra.mxu0 0.0
  %1143 = vmatprep.subr.mxu0 0.0
  %1144 = vmatpush1.msra.mxu0 0.0
  %1145 = vmatprep.subr.mxu0 0.0
  %1146 = vmatpush1.msra.mxu0 0.0
  %1147 = vmatprep.subr.mxu0 0.0
  %1148 = vmatpush1.msra.mxu0 0.0
  %1149 = vmatprep.subr.mxu0 0.0
  %1150 = vmatpush1.msra.mxu0 0.0
  %1151 = vmatprep.subr.mxu0 0.0
  %1152 = vmatpush1.msra.mxu0 0.0
  %1153 = vmatprep.subr.mxu0 0.0
  %1154 = vmatpush1.msra.mxu0 0.0
  %1155 = vmatprep.subr.mxu0 0.0
  %1156 = vmatpush1.msra.mxu0 0.0
  %1157 = vmatprep.subr.mxu0 0.0
  %1158 = vmatpush1.msra.mxu0 0.0
  %1159 = vmatprep.subr.mxu0 0.0
  %1160 = vmatpush1.msra.mxu0 0.0
  %1161 = vmatprep.subr.mxu0 0.0
  %1162 = vmatpush1.msra.mxu0 0.0
  %1163 = vmatprep.subr.mxu0 0.0
  %1164 = vmatpush1.msra.mxu0 0.0
  %1165 = vmatprep.subr.mxu0 0.0
  %1166 = vmatpush1.msra.mxu0 0.0
  %1167 = vmatprep.subr.mxu0 0.0
  %1168 = vmatpush1.msra.mxu0 0.0
  %1169 = vmatprep.subr.mxu0 0.0
  %1170 = vmatpush1.msra.mxu0 0.0
  %1171 = vmatprep.mubr.f32.mxu0 0.0
  %1172 = vmatmul.mubr.f32.gmra.mrb[0].mxu0 %v1105
  %v1173 = vpop.f32.mrb[0].mxu0
  %v1174 = vadd.f32 0.0, %v1173
  %v1175 = vpop.f32.mrb[0].mxu0
  %v1176 = vadd.f32 0.0, %v1175
  %1177 = vdwg.mxu0
  %v1178 = vadd.f32 %v1103, %v1174
  %v1179 = vadd.f32 %v1104, %v1176
  %v1180 = vtanh.pop %v1178
  %v1181 = vtanh.pop %v1179
  %v1182 = vxor.u32 %v1178, 2147483648
  %v1183 = vxor.u32 %v1179, 2147483648
  %v1184 = vmul.f32 %v1182, 1.442695
  %v1185 = vpow.pop %v1184
  %v1186 = vmul.f32 %v1183, 1.442695
  %v1187 = vpow.pop %v1186
  %v1188 = vadd.f32 %v1185, 1.0
  %v1189 = vadd.f32 %v1187, 1.0
  %v1190 = vrcp.pop %v1188
  %v1191 = vmul.f32 1.0, %v1190
  %v1192 = vrcp.pop %v1189
  %v1193 = vmul.f32 1.0, %v1192
  %v1194 = vsel %vm272, %v1180, %v1191
  %v1195 = vsel %vm273, %v1181, %v1193
  %v1196 = vmul.f32 %v1194, %v996
  %v1197 = vmul.f32 %v1194, %v1195
  %1199 = vrot.lane.b32.xlu0 %v1197, 64
  %v1200 = vpop.permute.xlu0 %1199
  %v1202 = vadd.f32 %v1196, %v1200
  %v1203 = vtanh.pop %v1202
  %v1204 = vmul.f32 %v1195, %v1203
  %1206 = vrot.lane.b32.xlu0 %v1204, 64
  %v1207 = vpop.permute.xlu0 %1206
  %v1209 = vsel %vm279, %v1207, %v1099
  %1210 = vmatprep.subr.mxu0 %v46
  %1211 = vmatpush1.msra.mxu0 %v45
  %1212 = vmatprep.subr.mxu0 %v48
  %1213 = vmatpush1.msra.mxu0 %v47
  %1214 = vmatprep.subr.mxu0 %v50
  %1215 = vmatpush1.msra.mxu0 %v49
  %1216 = vmatprep.subr.mxu0 %v52
  %1217 = vmatpush1.msra.mxu0 %v51
  %1218 = vmatprep.subr.mxu0 %v54
  %1219 = vmatpush1.msra.mxu0 %v53
  %1220 = vmatprep.subr.mxu0 %v56
  %1221 = vmatpush1.msra.mxu0 %v55
  %1222 = vmatprep.subr.mxu0 %v58
  %1223 = vmatpush1.msra.mxu0 %v57
  %1224 = vmatprep.subr.mxu0 %v60
  %1225 = vmatpush1.msra.mxu0 %v59
  %1226 = vmatprep.subr.mxu0 %v62
  %1227 = vmatpush1.msra.mxu0 %v61
  %1228 = vmatprep.subr.mxu0 %v64
  %1229 = vmatpush1.msra.mxu0 %v63
  %1230 = vmatprep.subr.mxu0 %v66
  %1231 = vmatpush1.msra.mxu0 %v65
  %1232 = vmatprep.subr.mxu0 %v68
  %1233 = vmatpush1.msra.mxu0 %v67
  %1234 = vmatprep.subr.mxu0 %v70
  %1235 = vmatpush1.msra.mxu0 %v69
  %1236 = vmatprep.subr.mxu0 %v72
  %1237 = vmatpush1.msra.mxu0 %v71
  %1238 = vmatprep.subr.mxu0 %v74
  %1239 = vmatpush1.msra.mxu0 %v73
  %1240 = vmatprep.subr.mxu0 %v76
  %1241 = vmatpush1.msra.mxu0 %v75
  %1242 = vmatprep.subr.mxu0 0.0
  %1243 = vmatpush1.msra.mxu0 0.0
  %1244 = vmatprep.subr.mxu0 0.0
  %1245 = vmatpush1.msra.mxu0 0.0
  %1246 = vmatprep.subr.mxu0 0.0
  %1247 = vmatpush1.msra.mxu0 0.0
  %1248 = vmatprep.subr.mxu0 0.0
  %1249 = vmatpush1.msra.mxu0 0.0
  %1250 = vmatprep.subr.mxu0 0.0
  %1251 = vmatpush1.msra.mxu0 0.0
  %1252 = vmatprep.subr.mxu0 0.0
  %1253 = vmatpush1.msra.mxu0 0.0
  %1254 = vmatprep.subr.mxu0 0.0
  %1255 = vmatpush1.msra.mxu0 0.0
  %1256 = vmatprep.subr.mxu0 0.0
  %1257 = vmatpush1.msra.mxu0 0.0
  %1258 = vmatprep.subr.mxu0 0.0
  %1259 = vmatpush1.msra.mxu0 0.0
  %1260 = vmatprep.subr.mxu0 0.0
  %1261 = vmatpush1.msra.mxu0 0.0
  %1262 = vmatprep.subr.mxu0 0.0
  %1263 = vmatpush1.msra.mxu0 0.0
  %1264 = vmatprep.subr.mxu0 0.0
  %1265 = vmatpush1.msra.mxu0 0.0
  %1266 = vmatprep.subr.mxu0 0.0
  %1267 = vmatpush1.msra.mxu0 0.0
  %1268 = vmatprep.subr.mxu0 0.0
  %1269 = vmatpush1.msra.mxu0 0.0
  %1270 = vmatprep.subr.mxu0 0.0
  %1271 = vmatpush1.msra.mxu0 0.0
  %1272 = vmatprep.subr.mxu0 0.0
  %1273 = vmatpush1.msra.mxu0 0.0
  %1274 = vmatprep.mubr.f32.mxu0 0.0
  %1275 = vmatmul.mubr.f32.gmra.mrb[0].mxu0 %v1209
  %v1276 = vpop.f32.mrb[0].mxu0
  %v1277 = vadd.f32 %v82, %v1276
  %v1278 = vpop.f32.mrb[0].mxu0
  %v1279 = vadd.f32 %v86, %v1278
  %1280 = vdwg.mxu0
  %v1281 = vtanh.pop %v1277
  %v1282 = vtanh.pop %v1279
  %v1283 = vxor.u32 %v1277, 2147483648
  %v1284 = vxor.u32 %v1279, 2147483648
  %v1285 = vmul.f32 %v1283, 1.442695
  %v1286 = vpow.pop %v1285
  %v1287 = vmul.f32 %v1284, 1.442695
  %v1288 = vpow.pop %v1287
  %v1289 = vadd.f32 %v1286, 1.0
  %v1290 = vadd.f32 %v1288, 1.0
  %v1291 = vrcp.pop %v1289
  %v1292 = vmul.f32 1.0, %v1291
  %v1293 = vrcp.pop %v1290
  %v1294 = vmul.f32 1.0, %v1293
  %v1295 = vsel %vm272, %v1281, %v1292
  %v1296 = vsel %vm273, %v1282, %v1294
  %v1297 = vmul.f32 %v1295, %v1097
  %v1298 = vmul.f32 %v1295, %v1296
  %1300 = vrot.lane.b32.xlu0 %v1298, 64
  %v1301 = vpop.permute.xlu0 %1300
  %v1303 = vadd.f32 %v1297, %v1301
  %v1304 = vtanh.pop %v1303
  %v1305 = vmul.f32 %v1296, %v1304
  %s1306 = smul.u32 5, 2
  %s1307 = smul.addr %s1306, 8
  %s1308 = scalar_lea.vmem [#allocation2], %s1307
  %v1309 = vld [vmem:[%s1308] sm:$0xff]
  %v1310 = vld [vmem:[%s1308 + $0x8] sm:$0xff]
  %v1311 = vsel %vm279, %v1207, 0
  %1313 = vmatprep.subr.mxu0 %v30
  %1314 = vmatpush1.msra.mxu0 %v29
  %1315 = vmatprep.subr.mxu0 %v32
  %1316 = vmatpush1.msra.mxu0 %v31
  %1317 = vmatprep.subr.mxu0 %v34
  %1318 = vmatpush1.msra.mxu0 %v33
  %1319 = vmatprep.subr.mxu0 %v36
  %1320 = vmatpush1.msra.mxu0 %v35
  %1321 = vmatprep.subr.mxu0 %v38
  %1322 = vmatpush1.msra.mxu0 %v37
  %1323 = vmatprep.subr.mxu0 %v40
  %1324 = vmatpush1.msra.mxu0 %v39
  %1325 = vmatprep.subr.mxu0 %v42
  %1326 = vmatpush1.msra.mxu0 %v41
  %1327 = vmatprep.subr.mxu0 %v44
  %1328 = vmatpush1.msra.mxu0 %v43
  %1329 = vmatprep.subr.mxu0 0.0
  %1330 = vmatpush1.msra.mxu0 0.0
  %1331 = vmatprep.subr.mxu0 0.0
  %1332 = vmatpush1.msra.mxu0 0.0
  %1333 = vmatprep.subr.mxu0 0.0
  %1334 = vmatpush1.msra.mxu0 0.0
  %1335 = vmatprep.subr.mxu0 0.0
  %1336 = vmatpush1.msra.mxu0 0.0
  %1337 = vmatprep.subr.mxu0 0.0
  %1338 = vmatpush1.msra.mxu0 0.0
  %1339 = vmatprep.subr.mxu0 0.0
  %1340 = vmatpush1.msra.mxu0 0.0
  %1341 = vmatprep.subr.mxu0 0.0
  %1342 = vmatpush1.msra.mxu0 0.0
  %1343 = vmatprep.subr.mxu0 0.0
  %1344 = vmatpush1.msra.mxu0 0.0
  %1345 = vmatprep.subr.mxu0 0.0
  %1346 = vmatpush1.msra.mxu0 0.0
  %1347 = vmatprep.subr.mxu0 0.0
  %1348 = vmatpush1.msra.mxu0 0.0
  %1349 = vmatprep.subr.mxu0 0.0
  %1350 = vmatpush1.msra.mxu0 0.0
  %1351 = vmatprep.subr.mxu0 0.0
  %1352 = vmatpush1.msra.mxu0 0.0
  %1353 = vmatprep.subr.mxu0 0.0
  %1354 = vmatpush1.msra.mxu0 0.0
  %1355 = vmatprep.subr.mxu0 0.0
  %1356 = vmatpush1.msra.mxu0 0.0
  %1357 = vmatprep.subr.mxu0 0.0
  %1358 = vmatpush1.msra.mxu0 0.0
  %1359 = vmatprep.subr.mxu0 0.0
  %1360 = vmatpush1.msra.mxu0 0.0
  %1361 = vmatprep.subr.mxu0 0.0
  %1362 = vmatpush1.msra.mxu0 0.0
  %1363 = vmatprep.subr.mxu0 0.0
  %1364 = vmatpush1.msra.mxu0 0.0
  %1365 = vmatprep.subr.mxu0 0.0
  %1366 = vmatpush1.msra.mxu0 0.0
  %1367 = vmatprep.subr.mxu0 0.0
  %1368 = vmatpush1.msra.mxu0 0.0
  %1369 = vmatprep.subr.mxu0 0.0
  %1370 = vmatpush1.msra.mxu0 0.0
  %1371 = vmatprep.subr.mxu0 0.0
  %1372 = vmatpush1.msra.mxu0 0.0
  %1373 = vmatprep.subr.mxu0 0.0
  %1374 = vmatpush1.msra.mxu0 0.0
  %1375 = vmatprep.subr.mxu0 0.0
  %1376 = vmatpush1.msra.mxu0 0.0
  %1377 = vmatprep.mubr.f32.mxu0 0.0
  %1378 = vmatmul.mubr.f32.gmra.mrb[0].mxu0 %v1311
  %v1379 = vpop.f32.mrb[0].mxu0
  %v1380 = vadd.f32 0.0, %v1379
  %v1381 = vpop.f32.mrb[0].mxu0
  %v1382 = vadd.f32 0.0, %v1381
  %1383 = vdwg.mxu0
  %v1384 = vadd.f32 %v1309, %v1380
  %v1385 = vadd.f32 %v1310, %v1382
  %v1386 = vtanh.pop %v1384
  %v1387 = vtanh.pop %v1385
  %v1388 = vxor.u32 %v1384, 2147483648
  %v1389 = vxor.u32 %v1385, 2147483648
  %v1390 = vmul.f32 %v1388, 1.442695
  %v1391 = vpow.pop %v1390
  %v1392 = vmul.f32 %v1389, 1.442695
  %v1393 = vpow.pop %v1392
  %v1394 = vadd.f32 %v1391, 1.0
  %v1395 = vadd.f32 %v1393, 1.0
  %v1396 = vrcp.pop %v1394
  %v1397 = vmul.f32 1.0, %v1396
  %v1398 = vrcp.pop %v1395
  %v1399 = vmul.f32 1.0, %v1398
  %v1400 = vsel %vm272, %v1386, %v1397
  %v1401 = vsel %vm273, %v1387, %v1399
  %v1402 = vmul.f32 %v1400, %v1202
  %v1403 = vmul.f32 %v1400, %v1401
  %1405 = vrot.lane.b32.xlu0 %v1403, 64
  %v1406 = vpop.permute.xlu0 %1405
  %v1408 = vadd.f32 %v1402, %v1406
  %v1409 = vtanh.pop %v1408
  %v1410 = vmul.f32 %v1401, %v1409
  %1412 = vrot.lane.b32.xlu0 %v1410, 64
  %v1413 = vpop.permute.xlu0 %1412
  %v1415 = vsel %vm279, %v1413, %v1305
  %1416 = vmatprep.subr.mxu0 %v46
  %1417 = vmatpush1.msra.mxu0 %v45
  %1418 = vmatprep.subr.mxu0 %v48
  %1419 = vmatpush1.msra.mxu0 %v47
  %1420 = vmatprep.subr.mxu0 %v50
  %1421 = vmatpush1.msra.mxu0 %v49
  %1422 = vmatprep.subr.mxu0 %v52
  %1423 = vmatpush1.msra.mxu0 %v51
  %1424 = vmatprep.subr.mxu0 %v54
  %1425 = vmatpush1.msra.mxu0 %v53
  %1426 = vmatprep.subr.mxu0 %v56
  %1427 = vmatpush1.msra.mxu0 %v55
  %1428 = vmatprep.subr.mxu0 %v58
  %1429 = vmatpush1.msra.mxu0 %v57
  %1430 = vmatprep.subr.mxu0 %v60
  %1431 = vmatpush1.msra.mxu0 %v59
  %1432 = vmatprep.subr.mxu0 %v62
  %1433 = vmatpush1.msra.mxu0 %v61
  %1434 = vmatprep.subr.mxu0 %v64
  %1435 = vmatpush1.msra.mxu0 %v63
  %1436 = vmatprep.subr.mxu0 %v66
  %1437 = vmatpush1.msra.mxu0 %v65
  %1438 = vmatprep.subr.mxu0 %v68
  %1439 = vmatpush1.msra.mxu0 %v67
  %1440 = vmatprep.subr.mxu0 %v70
  %1441 = vmatpush1.msra.mxu0 %v69
  %1442 = vmatprep.subr.mxu0 %v72
  %1443 = vmatpush1.msra.mxu0 %v71
  %1444 = vmatprep.subr.mxu0 %v74
  %1445 = vmatpush1.msra.mxu0 %v73
  %1446 = vmatprep.subr.mxu0 %v76
  %1447 = vmatpush1.msra.mxu0 %v75
  %1448 = vmatprep.subr.mxu0 0.0
  %1449 = vmatpush1.msra.mxu0 0.0
  %1450 = vmatprep.subr.mxu0 0.0
  %1451 = vmatpush1.msra.mxu0 0.0
  %1452 = vmatprep.subr.mxu0 0.0
  %1453 = vmatpush1.msra.mxu0 0.0
  %1454 = vmatprep.subr.mxu0 0.0
  %1455 = vmatpush1.msra.mxu0 0.0
  %1456 = vmatprep.subr.mxu0 0.0
  %1457 = vmatpush1.msra.mxu0 0.0
  %1458 = vmatprep.subr.mxu0 0.0
  %1459 = vmatpush1.msra.mxu0 0.0
  %1460 = vmatprep.subr.mxu0 0.0
  %1461 = vmatpush1.msra.mxu0 0.0
  %1462 = vmatprep.subr.mxu0 0.0
  %1463 = vmatpush1.msra.mxu0 0.0
  %1464 = vmatprep.subr.mxu0 0.0
  %1465 = vmatpush1.msra.mxu0 0.0
  %1466 = vmatprep.subr.mxu0 0.0
  %1467 = vmatpush1.msra.mxu0 0.0
  %1468 = vmatprep.subr.mxu0 0.0
  %1469 = vmatpush1.msra.mxu0 0.0
  %1470 = vmatprep.subr.mxu0 0.0
  %1471 = vmatpush1.msra.mxu0 0.0
  %1472 = vmatprep.subr.mxu0 0.0
  %1473 = vmatpush1.msra.mxu0 0.0
  %1474 = vmatprep.subr.mxu0 0.0
  %1475 = vmatpush1.msra.mxu0 0.0
  %1476 = vmatprep.subr.mxu0 0.0
  %1477 = vmatpush1.msra.mxu0 0.0
  %1478 = vmatprep.subr.mxu0 0.0
  %1479 = vmatpush1.msra.mxu0 0.0
  %1480 = vmatprep.mubr.f32.mxu0 0.0
  %1481 = vmatmul.mubr.f32.gmra.mrb[0].mxu0 %v1415
  %v1482 = vpop.f32.mrb[0].mxu0
  %v1483 = vadd.f32 %v82, %v1482
  %v1484 = vpop.f32.mrb[0].mxu0
  %v1485 = vadd.f32 %v86, %v1484
  %1486 = vdwg.mxu0
  %v1487 = vtanh.pop %v1483
  %v1488 = vtanh.pop %v1485
  %v1489 = vxor.u32 %v1483, 2147483648
  %v1490 = vxor.u32 %v1485, 2147483648
  %v1491 = vmul.f32 %v1489, 1.442695
  %v1492 = vpow.pop %v1491
  %v1493 = vmul.f32 %v1490, 1.442695
  %v1494 = vpow.pop %v1493
  %v1495 = vadd.f32 %v1492, 1.0
  %v1496 = vadd.f32 %v1494, 1.0
  %v1497 = vrcp.pop %v1495
  %v1498 = vmul.f32 1.0, %v1497
  %v1499 = vrcp.pop %v1496
  %v1500 = vmul.f32 1.0, %v1499
  %v1501 = vsel %vm272, %v1487, %v1498
  %v1502 = vsel %vm273, %v1488, %v1500
  %v1503 = vmul.f32 %v1501, %v1303
  %v1504 = vmul.f32 %v1501, %v1502
  %1506 = vrot.lane.b32.xlu0 %v1504, 64
  %v1507 = vpop.permute.xlu0 %1506
  %v1509 = vadd.f32 %v1503, %v1507
  %v1510 = vtanh.pop %v1509
  %v1511 = vmul.f32 %v1502, %v1510
  %s1512 = smul.u32 6, 2
  %s1513 = smul.addr %s1512, 8
  %s1514 = scalar_lea.vmem [#allocation2], %s1513
  %v1515 = vld [vmem:[%s1514] sm:$0xff]
  %v1516 = vld [vmem:[%s1514 + $0x8] sm:$0xff]
  %v1517 = vsel %vm279, %v1413, 0
  %1519 = vmatprep.subr.mxu0 %v30
  %1520 = vmatpush1.msra.mxu0 %v29
  %1521 = vmatprep.subr.mxu0 %v32
  %1522 = vmatpush1.msra.mxu0 %v31
  %1523 = vmatprep.subr.mxu0 %v34
  %1524 = vmatpush1.msra.mxu0 %v33
  %1525 = vmatprep.subr.mxu0 %v36
  %1526 = vmatpush1.msra.mxu0 %v35
  %1527 = vmatprep.subr.mxu0 %v38
  %1528 = vmatpush1.msra.mxu0 %v37
  %1529 = vmatprep.subr.mxu0 %v40
  %1530 = vmatpush1.msra.mxu0 %v39
  %1531 = vmatprep.subr.mxu0 %v42
  %1532 = vmatpush1.msra.mxu0 %v41
  %1533 = vmatprep.subr.mxu0 %v44
  %1534 = vmatpush1.msra.mxu0 %v43
  %1535 = vmatprep.subr.mxu0 0.0
  %1536 = vmatpush1.msra.mxu0 0.0
  %1537 = vmatprep.subr.mxu0 0.0
  %1538 = vmatpush1.msra.mxu0 0.0
  %1539 = vmatprep.subr.mxu0 0.0
  %1540 = vmatpush1.msra.mxu0 0.0
  %1541 = vmatprep.subr.mxu0 0.0
  %1542 = vmatpush1.msra.mxu0 0.0
  %1543 = vmatprep.subr.mxu0 0.0
  %1544 = vmatpush1.msra.mxu0 0.0
  %1545 = vmatprep.subr.mxu0 0.0
  %1546 = vmatpush1.msra.mxu0 0.0
  %1547 = vmatprep.subr.mxu0 0.0
  %1548 = vmatpush1.msra.mxu0 0.0
  %1549 = vmatprep.subr.mxu0 0.0
  %1550 = vmatpush1.msra.mxu0 0.0
  %1551 = vmatprep.subr.mxu0 0.0
  %1552 = vmatpush1.msra.mxu0 0.0
  %1553 = vmatprep.subr.mxu0 0.0
  %1554 = vmatpush1.msra.mxu0 0.0
  %1555 = vmatprep.subr.mxu0 0.0
  %1556 = vmatpush1.msra.mxu0 0.0
  %1557 = vmatprep.subr.mxu0 0.0
  %1558 = vmatpush1.msra.mxu0 0.0
  %1559 = vmatprep.subr.mxu0 0.0
  %1560 = vmatpush1.msra.mxu0 0.0
  %1561 = vmatprep.subr.mxu0 0.0
  %1562 = vmatpush1.msra.mxu0 0.0
  %1563 = vmatprep.subr.mxu0 0.0
  %1564 = vmatpush1.msra.mxu0 0.0
  %1565 = vmatprep.subr.mxu0 0.0
  %1566 = vmatpush1.msra.mxu0 0.0
  %1567 = vmatprep.subr.mxu0 0.0
  %1568 = vmatpush1.msra.mxu0 0.0
  %1569 = vmatprep.subr.mxu0 0.0
  %1570 = vmatpush1.msra.mxu0 0.0
  %1571 = vmatprep.subr.mxu0 0.0
  %1572 = vmatpush1.msra.mxu0 0.0
  %1573 = vmatprep.subr.mxu0 0.0
  %1574 = vmatpush1.msra.mxu0 0.0
  %1575 = vmatprep.subr.mxu0 0.0
  %1576 = vmatpush1.msra.mxu0 0.0
  %1577 = vmatprep.subr.mxu0 0.0
  %1578 = vmatpush1.msra.mxu0 0.0
  %1579 = vmatprep.subr.mxu0 0.0
  %1580 = vmatpush1.msra.mxu0 0.0
  %1581 = vmatprep.subr.mxu0 0.0
  %1582 = vmatpush1.msra.mxu0 0.0
  %1583 = vmatprep.mubr.f32.mxu0 0.0
  %1584 = vmatmul.mubr.f32.gmra.mrb[0].mxu0 %v1517
  %v1585 = vpop.f32.mrb[0].mxu0
  %v1586 = vadd.f32 0.0, %v1585
  %v1587 = vpop.f32.mrb[0].mxu0
  %v1588 = vadd.f32 0.0, %v1587
  %1589 = vdwg.mxu0
  %v1590 = vadd.f32 %v1515, %v1586
  %v1591 = vadd.f32 %v1516, %v1588
  %v1592 = vtanh.pop %v1590
  %v1593 = vtanh.pop %v1591
  %v1594 = vxor.u32 %v1590, 2147483648
  %v1595 = vxor.u32 %v1591, 2147483648
  %v1596 = vmul.f32 %v1594, 1.442695
  %v1597 = vpow.pop %v1596
  %v1598 = vmul.f32 %v1595, 1.442695
  %v1599 = vpow.pop %v1598
  %v1600 = vadd.f32 %v1597, 1.0
  %v1601 = vadd.f32 %v1599, 1.0
  %v1602 = vrcp.pop %v1600
  %v1603 = vmul.f32 1.0, %v1602
  %v1604 = vrcp.pop %v1601
  %v1605 = vmul.f32 1.0, %v1604
  %v1606 = vsel %vm272, %v1592, %v1603
  %v1607 = vsel %vm273, %v1593, %v1605
  %v1608 = vmul.f32 %v1606, %v1408
  %v1609 = vmul.f32 %v1606, %v1607
  %1611 = vrot.lane.b32.xlu0 %v1609, 64
  %v1612 = vpop.permute.xlu0 %1611
  %v1614 = vadd.f32 %v1608, %v1612
  %v1615 = vtanh.pop %v1614
  %v1616 = vmul.f32 %v1607, %v1615
  %1618 = vrot.lane.b32.xlu0 %v1616, 64
  %v1619 = vpop.permute.xlu0 %1618
  %v1621 = vsel %vm279, %v1619, %v1511
  %1622 = vmatprep.subr.mxu0 %v46
  %1623 = vmatpush1.msra.mxu0 %v45
  %1624 = vmatprep.subr.mxu0 %v48
  %1625 = vmatpush1.msra.mxu0 %v47
  %1626 = vmatprep.subr.mxu0 %v50
  %1627 = vmatpush1.msra.mxu0 %v49
  %1628 = vmatprep.subr.mxu0 %v52
  %1629 = vmatpush1.msra.mxu0 %v51
  %1630 = vmatprep.subr.mxu0 %v54
  %1631 = vmatpush1.msra.mxu0 %v53
  %1632 = vmatprep.subr.mxu0 %v56
  %1633 = vmatpush1.msra.mxu0 %v55
  %1634 = vmatprep.subr.mxu0 %v58
  %1635 = vmatpush1.msra.mxu0 %v57
  %1636 = vmatprep.subr.mxu0 %v60
  %1637 = vmatpush1.msra.mxu0 %v59
  %1638 = vmatprep.subr.mxu0 %v62
  %1639 = vmatpush1.msra.mxu0 %v61
  %1640 = vmatprep.subr.mxu0 %v64
  %1641 = vmatpush1.msra.mxu0 %v63
  %1642 = vmatprep.subr.mxu0 %v66
  %1643 = vmatpush1.msra.mxu0 %v65
  %1644 = vmatprep.subr.mxu0 %v68
  %1645 = vmatpush1.msra.mxu0 %v67
  %1646 = vmatprep.subr.mxu0 %v70
  %1647 = vmatpush1.msra.mxu0 %v69
  %1648 = vmatprep.subr.mxu0 %v72
  %1649 = vmatpush1.msra.mxu0 %v71
  %1650 = vmatprep.subr.mxu0 %v74
  %1651 = vmatpush1.msra.mxu0 %v73
  %1652 = vmatprep.subr.mxu0 %v76
  %1653 = vmatpush1.msra.mxu0 %v75
  %1654 = vmatprep.subr.mxu0 0.0
  %1655 = vmatpush1.msra.mxu0 0.0
  %1656 = vmatprep.subr.mxu0 0.0
  %1657 = vmatpush1.msra.mxu0 0.0
  %1658 = vmatprep.subr.mxu0 0.0
  %1659 = vmatpush1.msra.mxu0 0.0
  %1660 = vmatprep.subr.mxu0 0.0
  %1661 = vmatpush1.msra.mxu0 0.0
  %1662 = vmatprep.subr.mxu0 0.0
  %1663 = vmatpush1.msra.mxu0 0.0
  %1664 = vmatprep.subr.mxu0 0.0
  %1665 = vmatpush1.msra.mxu0 0.0
  %1666 = vmatprep.subr.mxu0 0.0
  %1667 = vmatpush1.msra.mxu0 0.0
  %1668 = vmatprep.subr.mxu0 0.0
  %1669 = vmatpush1.msra.mxu0 0.0
  %1670 = vmatprep.subr.mxu0 0.0
  %1671 = vmatpush1.msra.mxu0 0.0
  %1672 = vmatprep.subr.mxu0 0.0
  %1673 = vmatpush1.msra.mxu0 0.0
  %1674 = vmatprep.subr.mxu0 0.0
  %1675 = vmatpush1.msra.mxu0 0.0
  %1676 = vmatprep.subr.mxu0 0.0
  %1677 = vmatpush1.msra.mxu0 0.0
  %1678 = vmatprep.subr.mxu0 0.0
  %1679 = vmatpush1.msra.mxu0 0.0
  %1680 = vmatprep.subr.mxu0 0.0
  %1681 = vmatpush1.msra.mxu0 0.0
  %1682 = vmatprep.subr.mxu0 0.0
  %1683 = vmatpush1.msra.mxu0 0.0
  %1684 = vmatprep.subr.mxu0 0.0
  %1685 = vmatpush1.msra.mxu0 0.0
  %1686 = vmatprep.mubr.f32.mxu0 0.0
  %1687 = vmatmul.mubr.f32.gmra.mrb[0].mxu0 %v1621
  %v1688 = vpop.f32.mrb[0].mxu0
  %v1689 = vadd.f32 %v82, %v1688
  %v1690 = vpop.f32.mrb[0].mxu0
  %v1691 = vadd.f32 %v86, %v1690
  %1692 = vdwg.mxu0
  %v1693 = vtanh.pop %v1689
  %v1694 = vtanh.pop %v1691
  %v1695 = vxor.u32 %v1689, 2147483648
  %v1696 = vxor.u32 %v1691, 2147483648
  %v1697 = vmul.f32 %v1695, 1.442695
  %v1698 = vpow.pop %v1697
  %v1699 = vmul.f32 %v1696, 1.442695
  %v1700 = vpow.pop %v1699
  %v1701 = vadd.f32 %v1698, 1.0
  %v1702 = vadd.f32 %v1700, 1.0
  %v1703 = vrcp.pop %v1701
  %v1704 = vmul.f32 1.0, %v1703
  %v1705 = vrcp.pop %v1702
  %v1706 = vmul.f32 1.0, %v1705
  %v1707 = vsel %vm272, %v1693, %v1704
  %v1708 = vsel %vm273, %v1694, %v1706
  %v1709 = vmul.f32 %v1707, %v1509
  %v1710 = vmul.f32 %v1707, %v1708
  %1712 = vrot.lane.b32.xlu0 %v1710, 64
  %v1713 = vpop.permute.xlu0 %1712
  %v1715 = vadd.f32 %v1709, %v1713
  %v1716 = vtanh.pop %v1715
  %v1717 = vmul.f32 %v1708, %v1716
  %s1718 = smul.u32 7, 2
  %s1719 = smul.addr %s1718, 8
  %s1720 = scalar_lea.vmem [#allocation2], %s1719
  %v1721 = vld [vmem:[%s1720] sm:$0xff]
  %v1722 = vld [vmem:[%s1720 + $0x8] sm:$0xff]
  %v1723 = vsel %vm279, %v1619, 0
  %1725 = vmatprep.subr.mxu0 %v30
  %1726 = vmatpush1.msra.mxu0 %v29
  %1727 = vmatprep.subr.mxu0 %v32
  %1728 = vmatpush1.msra.mxu0 %v31
  %1729 = vmatprep.subr.mxu0 %v34
  %1730 = vmatpush1.msra.mxu0 %v33
  %1731 = vmatprep.subr.mxu0 %v36
  %1732 = vmatpush1.msra.mxu0 %v35
  %1733 = vmatprep.subr.mxu0 %v38
  %1734 = vmatpush1.msra.mxu0 %v37
  %1735 = vmatprep.subr.mxu0 %v40
  %1736 = vmatpush1.msra.mxu0 %v39
  %1737 = vmatprep.subr.mxu0 %v42
  %1738 = vmatpush1.msra.mxu0 %v41
  %1739 = vmatprep.subr.mxu0 %v44
  %1740 = vmatpush1.msra.mxu0 %v43
  %1741 = vmatprep.subr.mxu0 0.0
  %1742 = vmatpush1.msra.mxu0 0.0
  %1743 = vmatprep.subr.mxu0 0.0
  %1744 = vmatpush1.msra.mxu0 0.0
  %1745 = vmatprep.subr.mxu0 0.0
  %1746 = vmatpush1.msra.mxu0 0.0
  %1747 = vmatprep.subr.mxu0 0.0
  %1748 = vmatpush1.msra.mxu0 0.0
  %1749 = vmatprep.subr.mxu0 0.0
  %1750 = vmatpush1.msra.mxu0 0.0
  %1751 = vmatprep.subr.mxu0 0.0
  %1752 = vmatpush1.msra.mxu0 0.0
  %1753 = vmatprep.subr.mxu0 0.0
  %1754 = vmatpush1.msra.mxu0 0.0
  %1755 = vmatprep.subr.mxu0 0.0
  %1756 = vmatpush1.msra.mxu0 0.0
  %1757 = vmatprep.subr.mxu0 0.0
  %1758 = vmatpush1.msra.mxu0 0.0
  %1759 = vmatprep.subr.mxu0 0.0
  %1760 = vmatpush1.msra.mxu0 0.0
  %1761 = vmatprep.subr.mxu0 0.0
  %1762 = vmatpush1.msra.mxu0 0.0
  %1763 = vmatprep.subr.mxu0 0.0
  %1764 = vmatpush1.msra.mxu0 0.0
  %1765 = vmatprep.subr.mxu0 0.0
  %1766 = vmatpush1.msra.mxu0 0.0
  %1767 = vmatprep.subr.mxu0 0.0
  %1768 = vmatpush1.msra.mxu0 0.0
  %1769 = vmatprep.subr.mxu0 0.0
  %1770 = vmatpush1.msra.mxu0 0.0
  %1771 = vmatprep.subr.mxu0 0.0
  %1772 = vmatpush1.msra.mxu0 0.0
  %1773 = vmatprep.subr.mxu0 0.0
  %1774 = vmatpush1.msra.mxu0 0.0
  %1775 = vmatprep.subr.mxu0 0.0
  %1776 = vmatpush1.msra.mxu0 0.0
  %1777 = vmatprep.subr.mxu0 0.0
  %1778 = vmatpush1.msra.mxu0 0.0
  %1779 = vmatprep.subr.mxu0 0.0
  %1780 = vmatpush1.msra.mxu0 0.0
  %1781 = vmatprep.subr.mxu0 0.0
  %1782 = vmatpush1.msra.mxu0 0.0
  %1783 = vmatprep.subr.mxu0 0.0
  %1784 = vmatpush1.msra.mxu0 0.0
  %1785 = vmatprep.subr.mxu0 0.0
  %1786 = vmatpush1.msra.mxu0 0.0
  %1787 = vmatprep.subr.mxu0 0.0
  %1788 = vmatpush1.msra.mxu0 0.0
  %1789 = vmatprep.mubr.f32.mxu0 0.0
  %1790 = vmatmul.mubr.f32.gmra.mrb[0].mxu0 %v1723
  %v1791 = vpop.f32.mrb[0].mxu0
  %v1792 = vadd.f32 0.0, %v1791
  %v1793 = vpop.f32.mrb[0].mxu0
  %v1794 = vadd.f32 0.0, %v1793
  %1795 = vdwg.mxu0
  %v1796 = vadd.f32 %v1721, %v1792
  %v1797 = vadd.f32 %v1722, %v1794
  %v1798 = vtanh.pop %v1796
  %v1799 = vtanh.pop %v1797
  %v1800 = vxor.u32 %v1796, 2147483648
  %v1801 = vxor.u32 %v1797, 2147483648
  %v1802 = vmul.f32 %v1800, 1.442695
  %v1803 = vpow.pop %v1802
  %v1804 = vmul.f32 %v1801, 1.442695
  %v1805 = vpow.pop %v1804
  %v1806 = vadd.f32 %v1803, 1.0
  %v1807 = vadd.f32 %v1805, 1.0
  %v1808 = vrcp.pop %v1806
  %v1809 = vmul.f32 1.0, %v1808
  %v1810 = vrcp.pop %v1807
  %v1811 = vmul.f32 1.0, %v1810
  %v1812 = vsel %vm272, %v1798, %v1809
  %v1813 = vsel %vm273, %v1799, %v1811
  %v1814 = vmul.f32 %v1812, %v1614
  %v1815 = vmul.f32 %v1812, %v1813
  %1817 = vrot.lane.b32.xlu0 %v1815, 64
  %v1818 = vpop.permute.xlu0 %1817
  %v1820 = vadd.f32 %v1814, %v1818
  %v1821 = vtanh.pop %v1820
  %v1822 = vmul.f32 %v1813, %v1821
  %1824 = vrot.lane.b32.xlu0 %v1822, 64
  %v1825 = vpop.permute.xlu0 %1824
  %v1827 = vsel %vm279, %v1825, %v1717
  %1828 = vmatprep.subr.mxu0 %v46
  %1829 = vmatpush1.msra.mxu0 %v45
  %1830 = vmatprep.subr.mxu0 %v48
  %1831 = vmatpush1.msra.mxu0 %v47
  %1832 = vmatprep.subr.mxu0 %v50
  %1833 = vmatpush1.msra.mxu0 %v49
  %1834 = vmatprep.subr.mxu0 %v52
  %1835 = vmatpush1.msra.mxu0 %v51
  %1836 = vmatprep.subr.mxu0 %v54
  %1837 = vmatpush1.msra.mxu0 %v53
  %1838 = vmatprep.subr.mxu0 %v56
  %1839 = vmatpush1.msra.mxu0 %v55
  %1840 = vmatprep.subr.mxu0 %v58
  %1841 = vmatpush1.msra.mxu0 %v57
  %1842 = vmatprep.subr.mxu0 %v60
  %1843 = vmatpush1.msra.mxu0 %v59
  %1844 = vmatprep.subr.mxu0 %v62
  %1845 = vmatpush1.msra.mxu0 %v61
  %1846 = vmatprep.subr.mxu0 %v64
  %1847 = vmatpush1.msra.mxu0 %v63
  %1848 = vmatprep.subr.mxu0 %v66
  %1849 = vmatpush1.msra.mxu0 %v65
  %1850 = vmatprep.subr.mxu0 %v68
  %1851 = vmatpush1.msra.mxu0 %v67
  %1852 = vmatprep.subr.mxu0 %v70
  %1853 = vmatpush1.msra.mxu0 %v69
  %1854 = vmatprep.subr.mxu0 %v72
  %1855 = vmatpush1.msra.mxu0 %v71
  %1856 = vmatprep.subr.mxu0 %v74
  %1857 = vmatpush1.msra.mxu0 %v73
  %1858 = vmatprep.subr.mxu0 %v76
  %1859 = vmatpush1.msra.mxu0 %v75
  %1860 = vmatprep.subr.mxu0 0.0
  %1861 = vmatpush1.msra.mxu0 0.0
  %1862 = vmatprep.subr.mxu0 0.0
  %1863 = vmatpush1.msra.mxu0 0.0
  %1864 = vmatprep.subr.mxu0 0.0
  %1865 = vmatpush1.msra.mxu0 0.0
  %1866 = vmatprep.subr.mxu0 0.0
  %1867 = vmatpush1.msra.mxu0 0.0
  %1868 = vmatprep.subr.mxu0 0.0
  %1869 = vmatpush1.msra.mxu0 0.0
  %1870 = vmatprep.subr.mxu0 0.0
  %1871 = vmatpush1.msra.mxu0 0.0
  %1872 = vmatprep.subr.mxu0 0.0
  %1873 = vmatpush1.msra.mxu0 0.0
  %1874 = vmatprep.subr.mxu0 0.0
  %1875 = vmatpush1.msra.mxu0 0.0
  %1876 = vmatprep.subr.mxu0 0.0
  %1877 = vmatpush1.msra.mxu0 0.0
  %1878 = vmatprep.subr.mxu0 0.0
  %1879 = vmatpush1.msra.mxu0 0.0
  %1880 = vmatprep.subr.mxu0 0.0
  %1881 = vmatpush1.msra.mxu0 0.0
  %1882 = vmatprep.subr.mxu0 0.0
  %1883 = vmatpush1.msra.mxu0 0.0
  %1884 = vmatprep.subr.mxu0 0.0
  %1885 = vmatpush1.msra.mxu0 0.0
  %1886 = vmatprep.subr.mxu0 0.0
  %1887 = vmatpush1.msra.mxu0 0.0
  %1888 = vmatprep.subr.mxu0 0.0
  %1889 = vmatpush1.msra.mxu0 0.0
  %1890 = vmatprep.subr.mxu0 0.0
  %1891 = vmatpush1.msra.mxu0 0.0
  %1892 = vmatprep.mubr.f32.mxu0 0.0
  %1893 = vmatmul.mubr.f32.gmra.mrb[0].mxu0 %v1827
  %v1894 = vpop.f32.mrb[0].mxu0
  %v1895 = vadd.f32 %v82, %v1894
  %v1896 = vpop.f32.mrb[0].mxu0
  %v1897 = vadd.f32 %v86, %v1896
  %1898 = vdwg.mxu0
  %v1899 = vtanh.pop %v1895
  %v1900 = vtanh.pop %v1897
  %v1901 = vxor.u32 %v1895, 2147483648
  %v1902 = vxor.u32 %v1897, 2147483648
  %v1903 = vmul.f32 %v1901, 1.442695
  %v1904 = vpow.pop %v1903
  %v1905 = vmul.f32 %v1902, 1.442695
  %v1906 = vpow.pop %v1905
  %v1907 = vadd.f32 %v1904, 1.0
  %v1908 = vadd.f32 %v1906, 1.0
  %v1909 = vrcp.pop %v1907
  %v1910 = vmul.f32 1.0, %v1909
  %v1911 = vrcp.pop %v1908
  %v1912 = vmul.f32 1.0, %v1911
  %v1913 = vsel %vm272, %v1899, %v1910
  %v1914 = vsel %vm273, %v1900, %v1912
  %v1915 = vmul.f32 %v1913, %v1715
  %v1916 = vmul.f32 %v1913, %v1914
  %1918 = vrot.lane.b32.xlu0 %v1916, 64
  %v1919 = vpop.permute.xlu0 %1918
  %v1921 = vadd.f32 %v1915, %v1919
  %v1922 = vtanh.pop %v1921
  %v1923 = vmul.f32 %v1914, %v1922
  %v1924 = vld [vmem:[%s6] sm:$0xff]
  %v1925 = vld [vmem:[%s6 + $0x8] sm:$0xff]
  %v1926 = vld [vmem:[%s6 + $0x10] sm:$0xff]
  %v1927 = vld [vmem:[%s6 + $0x18] sm:$0xff]
  %v1928 = vld [vmem:[%s6 + $0x20] sm:$0xff]
  %v1929 = vld [vmem:[%s6 + $0x28] sm:$0xff]
  %v1930 = vld [vmem:[%s6 + $0x30] sm:$0xff]
  %v1931 = vld [vmem:[%s6 + $0x38] sm:$0xff]
  %v1932 = vld [vmem:[%s7] sm:$0x1]
  %v1934 = vlaneseq
  %v1935 = vshrl.u32 %v1934, 7
  %v1936 = vsub.s32 0, %v1935
  %v1937 = vrot.slane %v1932, %v1936
  %1940 = vrot.lane.b32.xlu0 %v1923, 64
  %v1941 = vpop.permute.xlu0 %1940
  %v1942 = vsel %vm279, %v1941, 0
  %1944 = vmatprep.subr.mxu0 0.0
  %1945 = vmatpush1.msra.mxu0 %v1924
  %1946 = vmatprep.subr.mxu0 0.0
  %1947 = vmatpush1.msra.mxu0 %v1925
  %1948 = vmatprep.subr.mxu0 0.0
  %1949 = vmatpush1.msra.mxu0 %v1926
  %1950 = vmatprep.subr.mxu0 0.0
  %1951 = vmatpush1.msra.mxu0 %v1927
  %1952 = vmatprep.subr.mxu0 0.0
  %1953 = vmatpush1.msra.mxu0 %v1928
  %1954 = vmatprep.subr.mxu0 0.0
  %1955 = vmatpush1.msra.mxu0 %v1929
  %1956 = vmatprep.subr.mxu0 0.0
  %1957 = vmatpush1.msra.mxu0 %v1930
  %1958 = vmatprep.subr.mxu0 0.0
  %1959 = vmatpush1.msra.mxu0 %v1931
  %1960 = vmatprep.subr.mxu0 0.0
  %1961 = vmatpush1.msra.mxu0 0.0
  %1962 = vmatprep.subr.mxu0 0.0
  %1963 = vmatpush1.msra.mxu0 0.0
  %1964 = vmatprep.subr.mxu0 0.0
  %1965 = vmatpush1.msra.mxu0 0.0
  %1966 = vmatprep.subr.mxu0 0.0
  %1967 = vmatpush1.msra.mxu0 0.0
  %1968 = vmatprep.subr.mxu0 0.0
  %1969 = vmatpush1.msra.mxu0 0.0
  %1970 = vmatprep.subr.mxu0 0.0
  %1971 = vmatpush1.msra.mxu0 0.0
  %1972 = vmatprep.subr.mxu0 0.0
  %1973 = vmatpush1.msra.mxu0 0.0
  %1974 = vmatprep.subr.mxu0 0.0
  %1975 = vmatpush1.msra.mxu0 0.0
  %1976 = vmatprep.subr.mxu0 0.0
  %1977 = vmatpush1.msra.mxu0 0.0
  %1978 = vmatprep.subr.mxu0 0.0
  %1979 = vmatpush1.msra.mxu0 0.0
  %1980 = vmatprep.subr.mxu0 0.0
  %1981 = vmatpush1.msra.mxu0 0.0
  %1982 = vmatprep.subr.mxu0 0.0
  %1983 = vmatpush1.msra.mxu0 0.0
  %1984 = vmatprep.subr.mxu0 0.0
  %1985 = vmatpush1.msra.mxu0 0.0
  %1986 = vmatprep.subr.mxu0 0.0
  %1987 = vmatpush1.msra.mxu0 0.0
  %1988 = vmatprep.subr.mxu0 0.0
  %1989 = vmatpush1.msra.mxu0 0.0
  %1990 = vmatprep.subr.mxu0 0.0
  %1991 = vmatpush1.msra.mxu0 0.0
  %1992 = vmatprep.subr.mxu0 0.0
  %1993 = vmatpush1.msra.mxu0 0.0
  %1994 = vmatprep.subr.mxu0 0.0
  %1995 = vmatpush1.msra.mxu0 0.0
  %1996 = vmatprep.subr.mxu0 0.0
  %1997 = vmatpush1.msra.mxu0 0.0
  %1998 = vmatprep.subr.mxu0 0.0
  %1999 = vmatpush1.msra.mxu0 0.0
  %2000 = vmatprep.subr.mxu0 0.0
  %2001 = vmatpush1.msra.mxu0 0.0
  %2002 = vmatprep.subr.mxu0 0.0
  %2003 = vmatpush1.msra.mxu0 0.0
  %2004 = vmatprep.subr.mxu0 0.0
  %2005 = vmatpush1.msra.mxu0 0.0
  %2006 = vmatprep.subr.mxu0 0.0
  %2007 = vmatpush1.msra.mxu0 0.0
  %2008 = vmatprep.mubr.f32.mxu0 0.0
  %2009 = vmatmul.mubr.f32.gmra.mrb[0].mxu0 %v1942
  %v2010 = vpop.f32.mrb[0].mxu0
  %v2011 = vadd.f32 %v1937, %v2010
  %v2012 = vpop.f32.mrb[0].mxu0
  %2013 = vdwg.mxu0
  %2014 = vst [vmem:[%s8] sm:$0xff] %v2011
  // Predicated region
  $region34: #{lstm_model_forward.1} parent=0 // pred_check
    _
  $region35: #{lstm_model_forward.1} parent=0 // pred_check_branch
    %2016 = sbr.rel (0) target = $region37
  $region36: #{lstm_model_forward.1} parent=0 // pred_region
    _
  $region37: #{lstm_model_forward.1} parent=0 // pred_fallthru
    _
  // Predicated region
  $region38: #{lstm_model_forward.1} parent=0 // pred_check
    _
  $region39: #{lstm_model_forward.1} parent=0 // pred_check_branch
    %2018 = sbr.rel (0) target = $region41
  $region40: #{lstm_model_forward.1} parent=0 // pred_region
    _
  $region41: #{lstm_model_forward.1} parent=0 // pred_fallthru
    _

</llo_original>
